<compile_context>
chip_gen: v6e
topology: v6e:2x2x1
jax: 0.10.0
libtpu: 0.0.40
codegen_flags: <defaults>
</compile_context>

<pallas_src>
import functools

import jax
import jax.numpy as jnp
from jax import lax
from jax.experimental import pallas as pl
from jax.experimental.pallas import tpu as pltpu


def _round_up(n, m):
    return ((n + m - 1) // m) * m


def _cdiv(a, b):
    return (a + b - 1) // b


def mlp_kernel(x_ref, w1_ref, b1_ref, w2_ref, b2_ref, w3_ref, b3_ref, o_ref,
               *, num_classes):
    # x arrives as f32 straight from HBM (no wrapper pad/cast round-trip);
    # cast once in-VMEM so all three matmuls hit the native bf16 MXU path
    # with f32 accumulation.
    x = x_ref[...].astype(jnp.bfloat16)

    # fc1 + ReLU (bias-add in f32; intermediate kept as bf16).
    h1 = jnp.dot(x, w1_ref[...], preferred_element_type=jnp.float32)
    h1 = jnp.maximum(h1 + b1_ref[...], 0.0).astype(jnp.bfloat16)

    # fc2 + ReLU
    h2 = jnp.dot(h1, w2_ref[...], preferred_element_type=jnp.float32)
    h2 = jnp.maximum(h2 + b2_ref[...], 0.0).astype(jnp.bfloat16)

    # fc3
    logits = jnp.dot(h2, w3_ref[...], preferred_element_type=jnp.float32)
    logits = logits + b3_ref[...]

    # Padded class columns carry logit 0; mask them so they cannot pollute
    # the softmax max/sum (do not remove when tuning).
    col = lax.broadcasted_iota(jnp.int32, logits.shape, dimension=1)
    logits = jnp.where(col < num_classes, logits, -1e30)

    # softmax over the class axis (dim=1); approx reciprocal runs on the EUP
    # (free slot). Rows sum to 1 within ~1e-3; switch approx=False if exact
    # normalization is required downstream.
    m = jnp.max(logits, axis=-1, keepdims=True)
    e = jnp.exp(logits - m)
    denom = jnp.sum(e, axis=-1, keepdims=True)
    o_ref[...] = (e * pl.reciprocal(denom, approx=True)).astype(o_ref.dtype)


def init_params(key, input_size=28 * 28, hidden_size=400, output_size=10):
    """PyTorch-Linear-style synthetic params, stored transposed as (in, out), f32."""
    ks = jax.random.split(key, 6)

    def linear(kw, kb, fan_in, fan_out):
        bound = 1.0 / jnp.sqrt(fan_in)
        w = jax.random.uniform(kw, (fan_in, fan_out), jnp.float32, -bound, bound)
        b = jax.random.uniform(kb, (1, fan_out), jnp.float32, -bound, bound)
        return w, b

    w1, b1 = linear(ks[0], ks[1], input_size, hidden_size)
    w2, b2 = linear(ks[2], ks[3], hidden_size, hidden_size)
    w3, b3 = linear(ks[4], ks[5], hidden_size, output_size)
    return (w1, b1, w2, b2, w3, b3)


def prepare_params(params):
    """One-time host-side prep: zero-pad hidden/output feature dims to multiples
    of 128 (400->512, 10->128), cast weights to bf16 (biases stay f32). The input
    dim stays at its natural size (784) -- x is consumed full-width by the kernel.
    Returns (padded_params, (input_size, output_size))."""
    w1, b1, w2, b2, w3, b3 = params
    input_size, hidden_size = w1.shape
    output_size = w3.shape[1]
    hid_p = _round_up(hidden_size, 128)   # 400 -> 512
    out_p = _round_up(output_size, 128)   # 10  -> 128

    def pad2(a, rows, cols, dtype):
        return jnp.pad(a, ((0, rows - a.shape[0]), (0, cols - a.shape[1]))).astype(dtype)

    # TODO(synk): for small-batch inference on v5e/v6e quantize weights to int8
    # (fp8 e4m3 on v7x -- no integer MXU path there) with per-column scales to
    # halve the dominant weight HBM traffic.
    padded = (
        pad2(w1, input_size, hid_p, jnp.bfloat16), pad2(b1, 1, hid_p, jnp.float32),
        pad2(w2, hid_p, hid_p, jnp.bfloat16), pad2(b2, 1, hid_p, jnp.float32),
        pad2(w3, hid_p, out_p, jnp.bfloat16), pad2(b3, 1, out_p, jnp.float32),
    )
    return padded, (input_size, output_size)


def mlp_forward(x, prepared, *, tm_max=1024, out_dtype=jnp.float32):
    """x: any shape whose trailing dims flatten to input_size (NCHW image ok)."""
    (w1, b1, w2, b2, w3, b3), (input_size, output_size) = prepared
    in_sz, hid_p = w1.shape
    out_p = w3.shape[1]

    x2d = x.reshape(-1, input_size).astype(jnp.float32)
    batch = x2d.shape[0]

    # Batch tile selection:
    #  * as large as possible (amortize ~0.35us/step overhead, MXU M-occupancy),
    #    capped at tm_max=1024 (total VMEM footprint stays ~10-15 MiB),
    #  * multiple of 16 sublanes (bf16 activations),
    #  * >= 2 grid steps once batch >= 32 so v7x's two TensorCores both get work,
    #  * tm = round_up(cdiv(batch, steps), 16) keeps batch-pad waste small.
    steps = max(_cdiv(batch, tm_max), 1)
    if batch >= 32:
        steps = max(steps, 2)
    tm = _round_up(_cdiv(batch, steps), 16)
    b_p = _round_up(batch, tm)
    grid = (b_p // tm,)

    # Only batch rows are padded (no-op when batch % tm == 0); the feature dim
    # stays at 784 and x stays f32 -- the bf16 cast happens inside the kernel.
    x_in = x2d if b_p == batch else jnp.pad(x2d, ((0, b_p - batch), (0, 0)))

    flops = 2 * b_p * (in_sz * hid_p + hid_p * hid_p + hid_p * out_p)
    bytes_accessed = (
        x_in.size * 4
        + (w1.size + w2.size + w3.size) * 2
        + (b1.size + b2.size + b3.size) * 4
        + b_p * out_p * jnp.dtype(out_dtype).itemsize
    )
    cost = pl.CostEstimate(flops=flops, transcendentals=b_p * out_p,
                           bytes_accessed=bytes_accessed)

    # TODO(synk): for repeated tiny-batch inference, hold the ~1.5 MiB of bf16
    # weights VMEM-resident across calls (cross-pallas_call prefetch); the
    # per-call weight DMA dominates at batch <= 64.
    out = pl.pallas_call(
        functools.partial(mlp_kernel, num_classes=output_size),
        out_shape=jax.ShapeDtypeStruct((b_p, out_p), out_dtype),
        grid=grid,
        in_specs=[
            pl.BlockSpec((tm, in_sz), lambda i: (i, 0)),      # x: tiled over batch
            pl.BlockSpec((in_sz, hid_p), lambda i: (0, 0)),   # weights/biases pinned
            pl.BlockSpec((1, hid_p), lambda i: (0, 0)),
            pl.BlockSpec((hid_p, hid_p), lambda i: (0, 0)),
            pl.BlockSpec((1, hid_p), lambda i: (0, 0)),
            pl.BlockSpec((hid_p, out_p), lambda i: (0, 0)),
            pl.BlockSpec((1, out_p), lambda i: (0, 0)),
        ],
        out_specs=pl.BlockSpec((tm, out_p), lambda i: (i, 0)),
        compiler_params=pltpu.CompilerParams(
            dimension_semantics=("parallel",)),
        cost_estimate=cost,
    )(x_in, w1, b1, w2, b2, w3, b3)

    # Slice off batch/class padding.
    return out[:batch, :output_size]


def _reference_forward(x, params):
    """Pure-JAX f32 reference (matches the PyTorch module's forward)."""
    w1, b1, w2, b2, w3, b3 = params
    x2d = x.reshape(-1, w1.shape[0]).astype(jnp.float32)
    h1 = jnp.maximum(x2d @ w1 + b1, 0.0)
    h2 = jnp.maximum(h1 @ w2 + b2, 0.0)
    logits = h2 @ w3 + b3
    return jax.nn.softmax(logits, axis=1)


if __name__ == "__main__":
    key = jax.random.PRNGKey(0)
    k_param, k_x, k_x2 = jax.random.split(key, 3)

    input_size, hidden_size, output_size = 28 * 28, 400, 10
    params = init_params(k_param, input_size, hidden_size, output_size)
    prepared = prepare_params(params)

    # MNIST-style NCHW input; forward flattens it to (-1, 784).
    x = jax.random.normal(k_x, (2, 1, 28, 28), jnp.float32)

    out = mlp_forward(x, prepared)
    out = jax.block_until_ready(out)

    assert out.shape == (2, output_size)
    # softmax rows sum to 1 (approx reciprocal -> loose tolerance)
    assert jnp.allclose(jnp.sum(out, axis=1), 1.0, atol=1e-2)
    # agrees with pure-JAX f32 reference within bf16 tolerance
    ref = _reference_forward(x, params)
    assert jnp.allclose(out, ref, atol=2e-2)

    # Exercise the multi-step (dual-TC) grid path at a modest batch as well.
    x_big = jax.random.normal(k_x2, (64, 1, 28, 28), jnp.float32)
    out_big = jax.block_until_ready(mlp_forward(x_big, prepared))
    ref_big = _reference_forward(x_big, params)
    assert out_big.shape == (64, output_size)
    assert jnp.allclose(out_big, ref_big, atol=2e-2)

    print("KERNEL_OK")
</pallas_src>

<mosaic_0001>
module attributes {stable_mosaic.version = 11 : i64} {
  func.func @mlp_kernel(%arg0: i32, %arg1: memref<16x784xf32, #tpu.memory_space<vmem>>, %arg2: memref<784x512xbf16, #tpu.memory_space<vmem>>, %arg3: memref<1x512xf32, #tpu.memory_space<vmem>>, %arg4: memref<512x512xbf16, #tpu.memory_space<vmem>>, %arg5: memref<1x512xf32, #tpu.memory_space<vmem>>, %arg6: memref<512x128xbf16, #tpu.memory_space<vmem>>, %arg7: memref<1x128xf32, #tpu.memory_space<vmem>>, %arg8: memref<16x128xf32, #tpu.memory_space<vmem>>) attributes {dimension_semantics = [#tpu.dimension_semantics<parallel>], iteration_bounds = array<i64: 1>, scalar_prefetch = 0 : i64, scratch_operands = 0 : i64, tpu.core_type = #tpu.core_type<tc>, window_params = [{transform_indices = @transform_0, window_bounds = array<i64: 16, 784>}, {pipeline_mode = #tpu.pipeline_mode<synchronous>, transform_indices = @transform_1, window_bounds = array<i64: 784, 512>}, {pipeline_mode = #tpu.pipeline_mode<synchronous>, transform_indices = @transform_2, window_bounds = array<i64: 1, 512>}, {pipeline_mode = #tpu.pipeline_mode<synchronous>, transform_indices = @transform_3, window_bounds = array<i64: 512, 512>}, {pipeline_mode = #tpu.pipeline_mode<synchronous>, transform_indices = @transform_4, window_bounds = array<i64: 1, 512>}, {pipeline_mode = #tpu.pipeline_mode<synchronous>, transform_indices = @transform_5, window_bounds = array<i64: 512, 128>}, {pipeline_mode = #tpu.pipeline_mode<synchronous>, transform_indices = @transform_6, window_bounds = array<i64: 1, 128>}, {transform_indices = @transform_7, window_bounds = array<i64: 16, 128>}]} {
    %c0 = arith.constant 0 : index
    %c0_0 = arith.constant 0 : index
    %0 = vector.load %arg1[%c0, %c0_0] : memref<16x784xf32, #tpu.memory_space<vmem>>, vector<16x784xf32>
    %1 = arith.truncf %0 : vector<16x784xf32> to vector<16x784xbf16>
    %c0_1 = arith.constant 0 : index
    %c0_2 = arith.constant 0 : index
    %2 = vector.load %arg2[%c0_1, %c0_2] : memref<784x512xbf16, #tpu.memory_space<vmem>>, vector<784x512xbf16>
    %cst = arith.constant dense<0.000000e+00> : vector<16x512xf32>
    %3 = tpu.matmul %1, %2, %cst {dimension_numbers = #tpu.dot_dimension_numbers<[1], [0], [0], [1], [0, 0, 1, 1], [], []>} : vector<16x784xbf16>, vector<784x512xbf16>, vector<16x512xf32> -> vector<16x512xf32>
    %c0_3 = arith.constant 0 : index
    %c0_4 = arith.constant 0 : index
    %4 = vector.load %arg3[%c0_3, %c0_4] : memref<1x512xf32, #tpu.memory_space<vmem>>, vector<1x512xf32>
    %5 = vector.broadcast %4 : vector<1x512xf32> to vector<16x512xf32>
    %6 = arith.addf %3, %5 : vector<16x512xf32>
    %cst_5 = arith.constant 0.000000e+00 : f32
    %7 = vector.broadcast %cst_5 : f32 to vector<16x512xf32>
    %8 = arith.maximumf %6, %7 : vector<16x512xf32>
    %9 = arith.truncf %8 : vector<16x512xf32> to vector<16x512xbf16>
    %c0_6 = arith.constant 0 : index
    %c0_7 = arith.constant 0 : index
    %10 = vector.load %arg4[%c0_6, %c0_7] : memref<512x512xbf16, #tpu.memory_space<vmem>>, vector<512x512xbf16>
    %cst_8 = arith.constant dense<0.000000e+00> : vector<16x512xf32>
    %11 = tpu.matmul %9, %10, %cst_8 {dimension_numbers = #tpu.dot_dimension_numbers<[1], [0], [0], [1], [0, 0, 1, 1], [], []>} : vector<16x512xbf16>, vector<512x512xbf16>, vector<16x512xf32> -> vector<16x512xf32>
    %c0_9 = arith.constant 0 : index
    %c0_10 = arith.constant 0 : index
    %12 = vector.load %arg5[%c0_9, %c0_10] : memref<1x512xf32, #tpu.memory_space<vmem>>, vector<1x512xf32>
    %13 = vector.broadcast %12 : vector<1x512xf32> to vector<16x512xf32>
    %14 = arith.addf %11, %13 : vector<16x512xf32>
    %cst_11 = arith.constant 0.000000e+00 : f32
    %15 = vector.broadcast %cst_11 : f32 to vector<16x512xf32>
    %16 = arith.maximumf %14, %15 : vector<16x512xf32>
    %17 = arith.truncf %16 : vector<16x512xf32> to vector<16x512xbf16>
    %c0_12 = arith.constant 0 : index
    %c0_13 = arith.constant 0 : index
    %18 = vector.load %arg6[%c0_12, %c0_13] : memref<512x128xbf16, #tpu.memory_space<vmem>>, vector<512x128xbf16>
    %cst_14 = arith.constant dense<0.000000e+00> : vector<16x128xf32>
    %19 = tpu.matmul %17, %18, %cst_14 {dimension_numbers = #tpu.dot_dimension_numbers<[1], [0], [0], [1], [0, 0, 1, 1], [], []>} : vector<16x512xbf16>, vector<512x128xbf16>, vector<16x128xf32> -> vector<16x128xf32>
    %c0_15 = arith.constant 0 : index
    %c0_16 = arith.constant 0 : index
    %20 = vector.load %arg7[%c0_15, %c0_16] : memref<1x128xf32, #tpu.memory_space<vmem>>, vector<1x128xf32>
    %21 = vector.broadcast %20 : vector<1x128xf32> to vector<16x128xf32>
    %22 = arith.addf %19, %21 : vector<16x128xf32>
    %23 = tpu.iota {dimensions = array<i32: 1>} : vector<16x128xi32>
    %c10_i32 = arith.constant 10 : i32
    %24 = vector.broadcast %c10_i32 : i32 to vector<16x128xi32>
    %25 = arith.cmpi slt, %23, %24 : vector<16x128xi32>
    %cst_17 = arith.constant -1.000000e+30 : f32
    %26 = vector.broadcast %cst_17 : f32 to vector<16x128xf32>
    %27 = arith.select %25, %22, %26 : vector<16x128xi1>, vector<16x128xf32>
    %cst_18 = arith.constant dense<0xFF800000> : vector<16xf32>
    %28 = vector.multi_reduction <maximumf>, %27, %cst_18 [1] : vector<16x128xf32> to vector<16xf32>
    %29 = vector.shape_cast %28 : vector<16xf32> to vector<16x1xf32>
    %30 = vector.broadcast %29 : vector<16x1xf32> to vector<16x128xf32>
    %31 = arith.subf %27, %30 : vector<16x128xf32>
    %32 = math.exp %31 : vector<16x128xf32>
    %cst_19 = arith.constant dense<0.000000e+00> : vector<16xf32>
    %33 = vector.multi_reduction <add>, %32, %cst_19 [1] : vector<16x128xf32> to vector<16xf32>
    %34 = vector.shape_cast %33 : vector<16xf32> to vector<16x1xf32>
    %35 = tpu.reciprocal %34 {approx = true} : vector<16x1xf32> -> vector<16x1xf32>
    %36 = vector.broadcast %35 : vector<16x1xf32> to vector<16x128xf32>
    %37 = arith.mulf %32, %36 : vector<16x128xf32>
    %c0_20 = arith.constant 0 : index
    %c0_21 = arith.constant 0 : index
    %38 = vector.load %arg8[%c0_20, %c0_21] : memref<16x128xf32, #tpu.memory_space<vmem>>, vector<16x128xf32>
    tpu.vector_store %arg8[%c0_20, %c0_21], %37 {strides = array<i32>} : memref<16x128xf32, #tpu.memory_space<vmem>>, vector<16x128xf32>,
    return
  }
  func.func @transform_0(%arg0: i32) -> (i32, i32) {
    %c0_i32 = arith.constant 0 : i32
    %c0_i32_0 = arith.constant 0 : i32
    return %arg0, %c0_i32 : i32, i32
  }
  func.func @transform_1(%arg0: i32) -> (i32, i32) {
    %c0_i32 = arith.constant 0 : i32
    %c0_i32_0 = arith.constant 0 : i32
    %c0_i32_1 = arith.constant 0 : i32
    return %c0_i32, %c0_i32_0 : i32, i32
  }
  func.func @transform_2(%arg0: i32) -> (i32, i32) {
    %c0_i32 = arith.constant 0 : i32
    %c0_i32_0 = arith.constant 0 : i32
    %c0_i32_1 = arith.constant 0 : i32
    return %c0_i32, %c0_i32_0 : i32, i32
  }
  func.func @transform_3(%arg0: i32) -> (i32, i32) {
    %c0_i32 = arith.constant 0 : i32
    %c0_i32_0 = arith.constant 0 : i32
    %c0_i32_1 = arith.constant 0 : i32
    return %c0_i32, %c0_i32_0 : i32, i32
  }
  func.func @transform_4(%arg0: i32) -> (i32, i32) {
    %c0_i32 = arith.constant 0 : i32
    %c0_i32_0 = arith.constant 0 : i32
    %c0_i32_1 = arith.constant 0 : i32
    return %c0_i32, %c0_i32_0 : i32, i32
  }
  func.func @transform_5(%arg0: i32) -> (i32, i32) {
    %c0_i32 = arith.constant 0 : i32
    %c0_i32_0 = arith.constant 0 : i32
    %c0_i32_1 = arith.constant 0 : i32
    return %c0_i32, %c0_i32_0 : i32, i32
  }
  func.func @transform_6(%arg0: i32) -> (i32, i32) {
    %c0_i32 = arith.constant 0 : i32
    %c0_i32_0 = arith.constant 0 : i32
    %c0_i32_1 = arith.constant 0 : i32
    return %c0_i32, %c0_i32_0 : i32, i32
  }
  func.func @transform_7(%arg0: i32) -> (i32, i32) {
    %c0_i32 = arith.constant 0 : i32
    %c0_i32_0 = arith.constant 0 : i32
    return %arg0, %c0_i32 : i32, i32
  }
}

</mosaic_0001>

<llo_original>
// kernel: tpu_custom_call.1
$region0: #{tpu_custom_call.1}
  #allocation0 [shape = 'u32[]', space=smem, size = 0x4, offset = 0x4, fixed_abs, tag = 'smem constant byte address 0x4 - core index']
  #allocation1 [shape = 'u32[144,128]{1,0:T(1,128)}', space=vmem, size = 0x12000, scoped, tag = 'internal scratch']
  %s0 = inlined_call_operand.hbm [shape: f32[16,784], index: 0, kind: input, shape index: {}]
  %s1 = inlined_call_operand.hbm [shape: bf16[784,512], index: 1, kind: input, shape index: {}]
  %s2 = inlined_call_operand.hbm [shape: f32[1,512], index: 2, kind: input, shape index: {}]
  %s3 = inlined_call_operand.hbm [shape: bf16[512,512], index: 3, kind: input, shape index: {}]
  %s4 = inlined_call_operand.vmem [shape: f32[1,512], index: 4, kind: input, shape index: {}]
  %s5 = inlined_call_operand.hbm [shape: bf16[512,128], index: 5, kind: input, shape index: {}]
  %s6 = inlined_call_operand.vmem [shape: f32[1,128], index: 6, kind: input, shape index: {}]
  %s7 = inlined_call_operand.hbm [shape: f32[16,128], index: 7, kind: output, shape index: {}]
  %s8 = sld [smem:[#allocation0]]
  $region58: #{tpu_custom_call.1} parent=0
    _
  %s10 = ssub.s32 1, %s8
  %s11 = scalar_select 0, %s10, %s8
  $region1: #{tpu_custom_call.1} parent=0
    #allocation2 [shape = 'u8[57344]{0}', space=vmem, size = 0xe000, scoped, tag = 'input window, operand 0, single buffered']
    #allocation3 [shape = 's32[1]{0}', space=sflag, size = 0x4, scoped, tag = 'scoped memory for tpu_custom_call.1']
    #allocation4 [shape = 's32[1]{0}', space=sflag, size = 0x4, scoped, tag = 'scoped memory for tpu_custom_call.1']
    #allocation5 [shape = 'u8[802816]{0}', space=vmem, size = 0xc4000, scoped, tag = 'input window, operand 1, single buffered']
    #allocation6 [shape = 's32[1]{0}', space=sflag, size = 0x4, scoped, tag = 'scoped memory for tpu_custom_call.1']
    #allocation7 [shape = 'u8[2048]{0}', space=vmem, size = 0x800, scoped, tag = 'input window, operand 2, single buffered']
    #allocation8 [shape = 'u8[524288]{0}', space=vmem, size = 0x80000, scoped, tag = 'input window, operand 3, single buffered']
    #allocation9 [shape = 's32[1]{0}', space=sflag, size = 0x4, scoped, tag = 'scoped memory for tpu_custom_call.1']
    #allocation10 [shape = 'u8[131072]{0}', space=vmem, size = 0x20000, scoped, tag = 'input window, operand 5, single buffered']
    #allocation11 [shape = 'u8[8192]{0}', space=vmem, size = 0x2000, scoped, tag = 'output window, operand 0, single buffered']
    %12 = vsyncpa [#allocation3], 0
    %13 = vsyncpa [#allocation6], 0
    %14 = vsyncpa [#allocation9], 0
    %15 = vsyncpa [#allocation4], 0
    // Predicated region
    $region2: #{tpu_custom_call.1} parent=1 // pred_check
      _
    $region3: #{tpu_custom_call.1} parent=1 // pred_check_branch
      %17 = sbr.rel (0) target = $region5
    $region4: #{tpu_custom_call.1} parent=1 // pred_region
      %s19 = ssub.s32 1792, 1792
      %20 = vsyncadd [#allocation3], %s19
      %s21 = sshll.u32 [#allocation2], 4
      %s22 = int_to_ptr.vmem [resolvable:$true] %s21
      %27 = dma.hbm_to_vmem [thread:$0]  %s0, 1792, %s22, [#allocation3], 896, 896, 56
    $region5: #{tpu_custom_call.1} parent=1 // pred_fallthru
      _
    // Predicated region
    $region6: #{tpu_custom_call.1} parent=1 // pred_check
      _
    $region7: #{tpu_custom_call.1} parent=1 // pred_check_branch
      %29 = sbr.rel (0) target = $region9
    $region8: #{tpu_custom_call.1} parent=1 // pred_region
      %s31 = ssub.s32 25088, 25088
      %32 = vsyncadd [#allocation6], %s31
      %s33 = sshll.u32 [#allocation5], 4
      %s34 = int_to_ptr.vmem [resolvable:$true] %s33
      %39 = dma.hbm_to_vmem [thread:$0]  %s1, 25088, %s34, [#allocation6], 256, 256, 16
    $region9: #{tpu_custom_call.1} parent=1 // pred_fallthru
      _
    // Predicated region
    $region10: #{tpu_custom_call.1} parent=1 // pred_check
      _
    $region11: #{tpu_custom_call.1} parent=1 // pred_check_branch
      %41 = sbr.rel (0) target = $region13
    $region12: #{tpu_custom_call.1} parent=1 // pred_region
      %s43 = ssub.s32 64, 64
      %44 = vsyncadd [#allocation6], %s43
      %s46 = sshll.u32 [#allocation7], 4
      %s47 = int_to_ptr.vmem [resolvable:$true] %s46
      %49 = dma.hbm_to_vmem [thread:$0]  %s2, 64, %s47, [#allocation6]
    $region13: #{tpu_custom_call.1} parent=1 // pred_fallthru
      _
    // Predicated region
    $region14: #{tpu_custom_call.1} parent=1 // pred_check
      _
    $region15: #{tpu_custom_call.1} parent=1 // pred_check_branch
      %51 = sbr.rel (0) target = $region17
    $region16: #{tpu_custom_call.1} parent=1 // pred_region
      %s53 = ssub.s32 16384, 16384
      %54 = vsyncadd [#allocation9], %s53
      %s55 = sshll.u32 [#allocation8], 4
      %s56 = int_to_ptr.vmem [resolvable:$true] %s55
      %61 = dma.hbm_to_vmem [thread:$0]  %s3, 16384, %s56, [#allocation9], 256, 256, 16
    $region17: #{tpu_custom_call.1} parent=1 // pred_fallthru
      _
    // Predicated region
    $region18: #{tpu_custom_call.1} parent=1 // pred_check
      _
    $region19: #{tpu_custom_call.1} parent=1 // pred_check_branch
      %63 = sbr.rel (0) target = $region21
    $region20: #{tpu_custom_call.1} parent=1 // pred_region
      _
    $region21: #{tpu_custom_call.1} parent=1 // pred_fallthru
      _
    // Predicated region
    $region22: #{tpu_custom_call.1} parent=1 // pred_check
      _
    $region23: #{tpu_custom_call.1} parent=1 // pred_check_branch
      %65 = sbr.rel (0) target = $region25
    $region24: #{tpu_custom_call.1} parent=1 // pred_region
      %s67 = ssub.s32 4096, 4096
      %68 = vsyncadd [#allocation9], %s67
      %s69 = sshll.u32 [#allocation10], 4
      %s70 = int_to_ptr.vmem [resolvable:$true] %s69
      %75 = dma.hbm_to_vmem [thread:$0]  %s5, 4096, %s70, [#allocation9], 64, 64, 4
    $region25: #{tpu_custom_call.1} parent=1 // pred_fallthru
      _
    // Predicated region
    $region26: #{tpu_custom_call.1} parent=1 // pred_check
      _
    $region27: #{tpu_custom_call.1} parent=1 // pred_check_branch
      %77 = sbr.rel (0) target = $region29
    $region28: #{tpu_custom_call.1} parent=1 // pred_region
      _
    $region29: #{tpu_custom_call.1} parent=1 // pred_fallthru
      _
    // Predicated region
    $region30: #{tpu_custom_call.1} parent=1 // pred_check
      _
    $region31: #{tpu_custom_call.1} parent=1 // pred_check_branch
      %79 = sbr.rel (0) target = $region33
    $region32: #{tpu_custom_call.1} parent=1 // pred_region
      %80 = dma.done [#allocation3], 1792
    $region33: #{tpu_custom_call.1} parent=1 // pred_fallthru
      _
    // Predicated region
    $region34: #{tpu_custom_call.1} parent=1 // pred_check
      _
    $region35: #{tpu_custom_call.1} parent=1 // pred_check_branch
      %82 = sbr.rel (0) target = $region37
    $region36: #{tpu_custom_call.1} parent=1 // pred_region
      %83 = dma.done [#allocation6], 25088
    $region37: #{tpu_custom_call.1} parent=1 // pred_fallthru
      _
    // Predicated region
    $region38: #{tpu_custom_call.1} parent=1 // pred_check
      _
    $region39: #{tpu_custom_call.1} parent=1 // pred_check_branch
      %85 = sbr.rel (0) target = $region41
    $region40: #{tpu_custom_call.1} parent=1 // pred_region
      %86 = dma.done [#allocation6], 64
    $region41: #{tpu_custom_call.1} parent=1 // pred_fallthru
      _
    // Predicated region
    $region42: #{tpu_custom_call.1} parent=1 // pred_check
      _
    $region43: #{tpu_custom_call.1} parent=1 // pred_check_branch
      %88 = sbr.rel (0) target = $region45
    $region44: #{tpu_custom_call.1} parent=1 // pred_region
      %89 = dma.done [#allocation9], 16384
    $region45: #{tpu_custom_call.1} parent=1 // pred_fallthru
      _
    // Predicated region
    $region46: #{tpu_custom_call.1} parent=1 // pred_check
      _
    $region47: #{tpu_custom_call.1} parent=1 // pred_check_branch
      %91 = sbr.rel (0) target = $region49
    $region48: #{tpu_custom_call.1} parent=1 // pred_region
      %92 = dma.done [#allocation9], 4096
    $region49: #{tpu_custom_call.1} parent=1 // pred_fallthru
      _
    %v94 = vld [vmem:[#allocation2] sm:$0xff]
    %v95 = vld [vmem:[#allocation2 + $0x8] sm:$0xff]
    %v96 = vld [vmem:[#allocation2 + $0x10] sm:$0xff]
    %v97 = vld [vmem:[#allocation2 + $0x18] sm:$0xff]
    %v98 = vld [vmem:[#allocation2 + $0x20] sm:$0xff]
    %v99 = vld [vmem:[#allocation2 + $0x28] sm:$0xff]
    %v100 = vld [vmem:[#allocation2 + $0x30] sm:$0xff]
    %v101 = vld [vmem:[#allocation2 + $0x38] sm:$0xff]
    %v102 = vld [vmem:[#allocation2 + $0x40] sm:$0xff]
    %v103 = vld [vmem:[#allocation2 + $0x48] sm:$0xff]
    %v104 = vld [vmem:[#allocation2 + $0x50] sm:$0xff]
    %v105 = vld [vmem:[#allocation2 + $0x58] sm:$0xff]
    %v106 = vld [vmem:[#allocation2 + $0x60] sm:$0xff]
    %v107 = vld [vmem:[#allocation2 + $0x68] sm:$0xff]
    %v108 = vpack.c.bf16 %v101, %v94
    %v109 = vpack.c.bf16 %v102, %v95
    %v110 = vpack.c.bf16 %v103, %v96
    %v111 = vpack.c.bf16 %v104, %v97
    %v112 = vpack.c.bf16 %v105, %v98
    %v113 = vpack.c.bf16 %v106, %v99
    %v114 = vpack.c.bf16 %v107, %v100
    %v115 = vld [vmem:[#allocation5] sm:$0xff]
    %v116 = vld [vmem:[#allocation5 + $0x8] sm:$0xff]
    %v117 = vld [vmem:[#allocation5 + $0x10] sm:$0xff]
    %v118 = vld [vmem:[#allocation5 + $0x18] sm:$0xff]
    %v119 = vld [vmem:[#allocation5 + $0x20] sm:$0xff]
    %v120 = vld [vmem:[#allocation5 + $0x28] sm:$0xff]
    %v121 = vld [vmem:[#allocation5 + $0x30] sm:$0xff]
    %v122 = vld [vmem:[#allocation5 + $0x38] sm:$0xff]
    %v123 = vld [vmem:[#allocation5 + $0x40] sm:$0xff]
    %v124 = vld [vmem:[#allocation5 + $0x48] sm:$0xff]
    %v125 = vld [vmem:[#allocation5 + $0x50] sm:$0xff]
    %v126 = vld [vmem:[#allocation5 + $0x58] sm:$0xff]
    %v127 = vld [vmem:[#allocation5 + $0x60] sm:$0xff]
    %v128 = vld [vmem:[#allocation5 + $0x68] sm:$0xff]
    %v129 = vld [vmem:[#allocation5 + $0x70] sm:$0xff]
    %v130 = vld [vmem:[#allocation5 + $0x78] sm:$0xff]
    %v131 = vld [vmem:[#allocation5 + $0x80] sm:$0xff]
    %v132 = vld [vmem:[#allocation5 + $0x88] sm:$0xff]
    %v133 = vld [vmem:[#allocation5 + $0x90] sm:$0xff]
    %v134 = vld [vmem:[#allocation5 + $0x98] sm:$0xff]
    %v135 = vld [vmem:[#allocation5 + $0xa0] sm:$0xff]
    %v136 = vld [vmem:[#allocation5 + $0xa8] sm:$0xff]
    %v137 = vld [vmem:[#allocation5 + $0xb0] sm:$0xff]
    %v138 = vld [vmem:[#allocation5 + $0xb8] sm:$0xff]
    %v139 = vld [vmem:[#allocation5 + $0xc0] sm:$0xff]
    %v140 = vld [vmem:[#allocation5 + $0xc8] sm:$0xff]
    %v141 = vld [vmem:[#allocation5 + $0xd0] sm:$0xff]
    %v142 = vld [vmem:[#allocation5 + $0xd8] sm:$0xff]
    %v143 = vld [vmem:[#allocation5 + $0xe0] sm:$0xff]
    %v144 = vld [vmem:[#allocation5 + $0xe8] sm:$0xff]
    %v145 = vld [vmem:[#allocation5 + $0xf0] sm:$0xff]
    %v146 = vld [vmem:[#allocation5 + $0xf8] sm:$0xff]
    %v147 = vld [vmem:[#allocation5 + $0x100] sm:$0xff]
    %v148 = vld [vmem:[#allocation5 + $0x108] sm:$0xff]
    %v149 = vld [vmem:[#allocation5 + $0x110] sm:$0xff]
    %v150 = vld [vmem:[#allocation5 + $0x118] sm:$0xff]
    %v151 = vld [vmem:[#allocation5 + $0x120] sm:$0xff]
    %v152 = vld [vmem:[#allocation5 + $0x128] sm:$0xff]
    %v153 = vld [vmem:[#allocation5 + $0x130] sm:$0xff]
    %v154 = vld [vmem:[#allocation5 + $0x138] sm:$0xff]
    %v155 = vld [vmem:[#allocation5 + $0x140] sm:$0xff]
    %v156 = vld [vmem:[#allocation5 + $0x148] sm:$0xff]
    %v157 = vld [vmem:[#allocation5 + $0x150] sm:$0xff]
    %v158 = vld [vmem:[#allocation5 + $0x158] sm:$0xff]
    %v159 = vld [vmem:[#allocation5 + $0x160] sm:$0xff]
    %v160 = vld [vmem:[#allocation5 + $0x168] sm:$0xff]
    %v161 = vld [vmem:[#allocation5 + $0x170] sm:$0xff]
    %v162 = vld [vmem:[#allocation5 + $0x178] sm:$0xff]
    %v163 = vld [vmem:[#allocation5 + $0x180] sm:$0xff]
    %v164 = vld [vmem:[#allocation5 + $0x188] sm:$0xff]
    %v165 = vld [vmem:[#allocation5 + $0x190] sm:$0xff]
    %v166 = vld [vmem:[#allocation5 + $0x198] sm:$0xff]
    %v167 = vld [vmem:[#allocation5 + $0x1a0] sm:$0xff]
    %v168 = vld [vmem:[#allocation5 + $0x1a8] sm:$0xff]
    %v169 = vld [vmem:[#allocation5 + $0x1b0] sm:$0xff]
    %v170 = vld [vmem:[#allocation5 + $0x1b8] sm:$0xff]
    %v171 = vld [vmem:[#allocation5 + $0x1c0] sm:$0xff]
    %v172 = vld [vmem:[#allocation5 + $0x1c8] sm:$0xff]
    %v173 = vld [vmem:[#allocation5 + $0x1d0] sm:$0xff]
    %v174 = vld [vmem:[#allocation5 + $0x1d8] sm:$0xff]
    %v175 = vld [vmem:[#allocation5 + $0x1e0] sm:$0xff]
    %v176 = vld [vmem:[#allocation5 + $0x1e8] sm:$0xff]
    %v177 = vld [vmem:[#allocation5 + $0x1f0] sm:$0xff]
    %v178 = vld [vmem:[#allocation5 + $0x1f8] sm:$0xff]
    %v179 = vld [vmem:[#allocation5 + $0x200] sm:$0xff]
    %v180 = vld [vmem:[#allocation5 + $0x208] sm:$0xff]
    %v181 = vld [vmem:[#allocation5 + $0x210] sm:$0xff]
    %v182 = vld [vmem:[#allocation5 + $0x218] sm:$0xff]
    %v183 = vld [vmem:[#allocation5 + $0x220] sm:$0xff]
    %v184 = vld [vmem:[#allocation5 + $0x228] sm:$0xff]
    %v185 = vld [vmem:[#allocation5 + $0x230] sm:$0xff]
    %v186 = vld [vmem:[#allocation5 + $0x238] sm:$0xff]
    %v187 = vld [vmem:[#allocation5 + $0x240] sm:$0xff]
    %v188 = vld [vmem:[#allocation5 + $0x248] sm:$0xff]
    %v189 = vld [vmem:[#allocation5 + $0x250] sm:$0xff]
    %v190 = vld [vmem:[#allocation5 + $0x258] sm:$0xff]
    %v191 = vld [vmem:[#allocation5 + $0x260] sm:$0xff]
    %v192 = vld [vmem:[#allocation5 + $0x268] sm:$0xff]
    %v193 = vld [vmem:[#allocation5 + $0x270] sm:$0xff]
    %v194 = vld [vmem:[#allocation5 + $0x278] sm:$0xff]
    %v195 = vld [vmem:[#allocation5 + $0x280] sm:$0xff]
    %v196 = vld [vmem:[#allocation5 + $0x288] sm:$0xff]
    %v197 = vld [vmem:[#allocation5 + $0x290] sm:$0xff]
    %v198 = vld [vmem:[#allocation5 + $0x298] sm:$0xff]
    %v199 = vld [vmem:[#allocation5 + $0x2a0] sm:$0xff]
    %v200 = vld [vmem:[#allocation5 + $0x2a8] sm:$0xff]
    %v201 = vld [vmem:[#allocation5 + $0x2b0] sm:$0xff]
    %v202 = vld [vmem:[#allocation5 + $0x2b8] sm:$0xff]
    %v203 = vld [vmem:[#allocation5 + $0x2c0] sm:$0xff]
    %v204 = vld [vmem:[#allocation5 + $0x2c8] sm:$0xff]
    %v205 = vld [vmem:[#allocation5 + $0x2d0] sm:$0xff]
    %v206 = vld [vmem:[#allocation5 + $0x2d8] sm:$0xff]
    %v207 = vld [vmem:[#allocation5 + $0x2e0] sm:$0xff]
    %v208 = vld [vmem:[#allocation5 + $0x2e8] sm:$0xff]
    %v209 = vld [vmem:[#allocation5 + $0x2f0] sm:$0xff]
    %v210 = vld [vmem:[#allocation5 + $0x2f8] sm:$0xff]
    %v211 = vld [vmem:[#allocation5 + $0x300] sm:$0xff]
    %v212 = vld [vmem:[#allocation5 + $0x308] sm:$0xff]
    %v213 = vld [vmem:[#allocation5 + $0x310] sm:$0xff]
    %v214 = vld [vmem:[#allocation5 + $0x318] sm:$0xff]
    %v215 = vld [vmem:[#allocation5 + $0x320] sm:$0xff]
    %v216 = vld [vmem:[#allocation5 + $0x328] sm:$0xff]
    %v217 = vld [vmem:[#allocation5 + $0x330] sm:$0xff]
    %v218 = vld [vmem:[#allocation5 + $0x338] sm:$0xff]
    %v219 = vld [vmem:[#allocation5 + $0x340] sm:$0xff]
    %v220 = vld [vmem:[#allocation5 + $0x348] sm:$0xff]
    %v221 = vld [vmem:[#allocation5 + $0x350] sm:$0xff]
    %v222 = vld [vmem:[#allocation5 + $0x358] sm:$0xff]
    %v223 = vld [vmem:[#allocation5 + $0x360] sm:$0xff]
    %v224 = vld [vmem:[#allocation5 + $0x368] sm:$0xff]
    %v225 = vld [vmem:[#allocation5 + $0x370] sm:$0xff]
    %v226 = vld [vmem:[#allocation5 + $0x378] sm:$0xff]
    %v227 = vld [vmem:[#allocation5 + $0x380] sm:$0xff]
    %v228 = vld [vmem:[#allocation5 + $0x388] sm:$0xff]
    %v229 = vld [vmem:[#allocation5 + $0x390] sm:$0xff]
    %v230 = vld [vmem:[#allocation5 + $0x398] sm:$0xff]
    %v231 = vld [vmem:[#allocation5 + $0x3a0] sm:$0xff]
    %v232 = vld [vmem:[#allocation5 + $0x3a8] sm:$0xff]
    %v233 = vld [vmem:[#allocation5 + $0x3b0] sm:$0xff]
    %v234 = vld [vmem:[#allocation5 + $0x3b8] sm:$0xff]
    %v235 = vld [vmem:[#allocation5 + $0x3c0] sm:$0xff]
    %v236 = vld [vmem:[#allocation5 + $0x3c8] sm:$0xff]
    %v237 = vld [vmem:[#allocation5 + $0x3d0] sm:$0xff]
    %v238 = vld [vmem:[#allocation5 + $0x3d8] sm:$0xff]
    %v239 = vld [vmem:[#allocation5 + $0x3e0] sm:$0xff]
    %v240 = vld [vmem:[#allocation5 + $0x3e8] sm:$0xff]
    %v241 = vld [vmem:[#allocation5 + $0x3f0] sm:$0xff]
    %v242 = vld [vmem:[#allocation5 + $0x3f8] sm:$0xff]
    %v243 = vld [vmem:[#allocation5 + $0x400] sm:$0xff]
    %v244 = vld [vmem:[#allocation5 + $0x408] sm:$0xff]
    %v245 = vld [vmem:[#allocation5 + $0x410] sm:$0xff]
    %v246 = vld [vmem:[#allocation5 + $0x418] sm:$0xff]
    %v247 = vld [vmem:[#allocation5 + $0x420] sm:$0xff]
    %v248 = vld [vmem:[#allocation5 + $0x428] sm:$0xff]
    %v249 = vld [vmem:[#allocation5 + $0x430] sm:$0xff]
    %v250 = vld [vmem:[#allocation5 + $0x438] sm:$0xff]
    %v251 = vld [vmem:[#allocation5 + $0x440] sm:$0xff]
    %v252 = vld [vmem:[#allocation5 + $0x448] sm:$0xff]
    %v253 = vld [vmem:[#allocation5 + $0x450] sm:$0xff]
    %v254 = vld [vmem:[#allocation5 + $0x458] sm:$0xff]
    %v255 = vld [vmem:[#allocation5 + $0x460] sm:$0xff]
    %v256 = vld [vmem:[#allocation5 + $0x468] sm:$0xff]
    %v257 = vld [vmem:[#allocation5 + $0x470] sm:$0xff]
    %v258 = vld [vmem:[#allocation5 + $0x478] sm:$0xff]
    %v259 = vld [vmem:[#allocation5 + $0x480] sm:$0xff]
    %v260 = vld [vmem:[#allocation5 + $0x488] sm:$0xff]
    %v261 = vld [vmem:[#allocation5 + $0x490] sm:$0xff]
    %v262 = vld [vmem:[#allocation5 + $0x498] sm:$0xff]
    %v263 = vld [vmem:[#allocation5 + $0x4a0] sm:$0xff]
    %v264 = vld [vmem:[#allocation5 + $0x4a8] sm:$0xff]
    %v265 = vld [vmem:[#allocation5 + $0x4b0] sm:$0xff]
    %v266 = vld [vmem:[#allocation5 + $0x4b8] sm:$0xff]
    %v267 = vld [vmem:[#allocation5 + $0x4c0] sm:$0xff]
    %v268 = vld [vmem:[#allocation5 + $0x4c8] sm:$0xff]
    %v269 = vld [vmem:[#allocation5 + $0x4d0] sm:$0xff]
    %v270 = vld [vmem:[#allocation5 + $0x4d8] sm:$0xff]
    %v271 = vld [vmem:[#allocation5 + $0x4e0] sm:$0xff]
    %v272 = vld [vmem:[#allocation5 + $0x4e8] sm:$0xff]
    %v273 = vld [vmem:[#allocation5 + $0x4f0] sm:$0xff]
    %v274 = vld [vmem:[#allocation5 + $0x4f8] sm:$0xff]
    %v275 = vld [vmem:[#allocation5 + $0x500] sm:$0xff]
    %v276 = vld [vmem:[#allocation5 + $0x508] sm:$0xff]
    %v277 = vld [vmem:[#allocation5 + $0x510] sm:$0xff]
    %v278 = vld [vmem:[#allocation5 + $0x518] sm:$0xff]
    %v279 = vld [vmem:[#allocation5 + $0x520] sm:$0xff]
    %v280 = vld [vmem:[#allocation5 + $0x528] sm:$0xff]
    %v281 = vld [vmem:[#allocation5 + $0x530] sm:$0xff]
    %v282 = vld [vmem:[#allocation5 + $0x538] sm:$0xff]
    %v283 = vld [vmem:[#allocation5 + $0x540] sm:$0xff]
    %v284 = vld [vmem:[#allocation5 + $0x548] sm:$0xff]
    %v285 = vld [vmem:[#allocation5 + $0x550] sm:$0xff]
    %v286 = vld [vmem:[#allocation5 + $0x558] sm:$0xff]
    %v287 = vld [vmem:[#allocation5 + $0x560] sm:$0xff]
    %v288 = vld [vmem:[#allocation5 + $0x568] sm:$0xff]
    %v289 = vld [vmem:[#allocation5 + $0x570] sm:$0xff]
    %v290 = vld [vmem:[#allocation5 + $0x578] sm:$0xff]
    %v291 = vld [vmem:[#allocation5 + $0x580] sm:$0xff]
    %v292 = vld [vmem:[#allocation5 + $0x588] sm:$0xff]
    %v293 = vld [vmem:[#allocation5 + $0x590] sm:$0xff]
    %v294 = vld [vmem:[#allocation5 + $0x598] sm:$0xff]
    %v295 = vld [vmem:[#allocation5 + $0x5a0] sm:$0xff]
    %v296 = vld [vmem:[#allocation5 + $0x5a8] sm:$0xff]
    %v297 = vld [vmem:[#allocation5 + $0x5b0] sm:$0xff]
    %v298 = vld [vmem:[#allocation5 + $0x5b8] sm:$0xff]
    %v299 = vld [vmem:[#allocation5 + $0x5c0] sm:$0xff]
    %v300 = vld [vmem:[#allocation5 + $0x5c8] sm:$0xff]
    %v301 = vld [vmem:[#allocation5 + $0x5d0] sm:$0xff]
    %v302 = vld [vmem:[#allocation5 + $0x5d8] sm:$0xff]
    %v303 = vld [vmem:[#allocation5 + $0x5e0] sm:$0xff]
    %v304 = vld [vmem:[#allocation5 + $0x5e8] sm:$0xff]
    %v305 = vld [vmem:[#allocation5 + $0x5f0] sm:$0xff]
    %v306 = vld [vmem:[#allocation5 + $0x5f8] sm:$0xff]
    %v307 = vld [vmem:[#allocation5 + $0x600] sm:$0xff]
    %v308 = vld [vmem:[#allocation5 + $0x608] sm:$0xff]
    %v309 = vld [vmem:[#allocation5 + $0x610] sm:$0xff]
    %v310 = vld [vmem:[#allocation5 + $0x618] sm:$0xff]
    %v311 = vld [vmem:[#allocation7] sm:$0xf]
    %v313 = vlaneseq
    %v314 = vshrl.u32 %v313, 7
    %v315 = vsub.s32 0, %v314
    %v316 = vrot.slane %v311, %v315
    %v317 = vlaneseq
    %v318 = vshrl.u32 %v317, 7
    %v319 = vsub.s32 1, %v318
    %v320 = vrot.slane %v311, %v319
    %v321 = vlaneseq
    %v322 = vshrl.u32 %v321, 7
    %v323 = vsub.s32 2, %v322
    %v324 = vrot.slane %v311, %v323
    %v325 = vlaneseq
    %v326 = vshrl.u32 %v325, 7
    %v327 = vsub.s32 3, %v326
    %v328 = vrot.slane %v311, %v327
    %v529 = vunpack.c.l.b16 %v115
    %v530 = vunpack.c.h.b16 %v115
    %v531 = vunpack.c.l.b16 %v116
    %v532 = vunpack.c.h.b16 %v116
    %v533 = vunpack.c.l.b16 %v117
    %v534 = vunpack.c.h.b16 %v117
    %v535 = vunpack.c.l.b16 %v118
    %v536 = vunpack.c.h.b16 %v118
    %v537 = vunpack.c.l.b16 %v119
    %v538 = vunpack.c.h.b16 %v119
    %v539 = vunpack.c.l.b16 %v120
    %v540 = vunpack.c.h.b16 %v120
    %v541 = vunpack.c.l.b16 %v121
    %v542 = vunpack.c.h.b16 %v121
    %v543 = vunpack.c.l.b16 %v122
    %v544 = vunpack.c.h.b16 %v122
    %v545 = vunpack.c.l.b16 %v123
    %v546 = vunpack.c.h.b16 %v123
    %v547 = vunpack.c.l.b16 %v124
    %v548 = vunpack.c.h.b16 %v124
    %v549 = vunpack.c.l.b16 %v125
    %v550 = vunpack.c.h.b16 %v125
    %v551 = vunpack.c.l.b16 %v126
    %v552 = vunpack.c.h.b16 %v126
    %v553 = vunpack.c.l.b16 %v127
    %v554 = vunpack.c.h.b16 %v127
    %v555 = vunpack.c.l.b16 %v128
    %v556 = vunpack.c.h.b16 %v128
    %v557 = vunpack.c.l.b16 %v129
    %v558 = vunpack.c.h.b16 %v129
    %v559 = vunpack.c.l.b16 %v130
    %v560 = vunpack.c.h.b16 %v130
    %v561 = vunpack.c.l.b16 %v131
    %v562 = vunpack.c.h.b16 %v131
    %v563 = vunpack.c.l.b16 %v132
    %v564 = vunpack.c.h.b16 %v132
    %v565 = vunpack.c.l.b16 %v133
    %v566 = vunpack.c.h.b16 %v133
    %v567 = vunpack.c.l.b16 %v134
    %v568 = vunpack.c.h.b16 %v134
    %v569 = vunpack.c.l.b16 %v135
    %v570 = vunpack.c.h.b16 %v135
    %v571 = vunpack.c.l.b16 %v136
    %v572 = vunpack.c.h.b16 %v136
    %v573 = vunpack.c.l.b16 %v137
    %v574 = vunpack.c.h.b16 %v137
    %v575 = vunpack.c.l.b16 %v138
    %v576 = vunpack.c.h.b16 %v138
    %v577 = vunpack.c.l.b16 %v139
    %v578 = vunpack.c.h.b16 %v139
    %v579 = vunpack.c.l.b16 %v140
    %v580 = vunpack.c.h.b16 %v140
    %v581 = vunpack.c.l.b16 %v141
    %v582 = vunpack.c.h.b16 %v141
    %v583 = vunpack.c.l.b16 %v142
    %v584 = vunpack.c.h.b16 %v142
    %v585 = vunpack.c.l.b16 %v143
    %v586 = vunpack.c.h.b16 %v143
    %v587 = vunpack.c.l.b16 %v144
    %v588 = vunpack.c.h.b16 %v144
    %v589 = vunpack.c.l.b16 %v145
    %v590 = vunpack.c.h.b16 %v145
    %v591 = vunpack.c.l.b16 %v146
    %v592 = vunpack.c.h.b16 %v146
    %v593 = vunpack.c.l.b16 %v147
    %v594 = vunpack.c.h.b16 %v147
    %v595 = vunpack.c.l.b16 %v148
    %v596 = vunpack.c.h.b16 %v148
    %v597 = vunpack.c.l.b16 %v149
    %v598 = vunpack.c.h.b16 %v149
    %v599 = vunpack.c.l.b16 %v150
    %v600 = vunpack.c.h.b16 %v150
    %v601 = vunpack.c.l.b16 %v151
    %v602 = vunpack.c.h.b16 %v151
    %v603 = vunpack.c.l.b16 %v152
    %v604 = vunpack.c.h.b16 %v152
    %v605 = vunpack.c.l.b16 %v153
    %v606 = vunpack.c.h.b16 %v153
    %v607 = vunpack.c.l.b16 %v154
    %v608 = vunpack.c.h.b16 %v154
    %v609 = vunpack.c.l.b16 %v155
    %v610 = vunpack.c.h.b16 %v155
    %v611 = vunpack.c.l.b16 %v156
    %v612 = vunpack.c.h.b16 %v156
    %v613 = vunpack.c.l.b16 %v157
    %v614 = vunpack.c.h.b16 %v157
    %v615 = vunpack.c.l.b16 %v158
    %v616 = vunpack.c.h.b16 %v158
    %v617 = vunpack.c.l.b16 %v159
    %v618 = vunpack.c.h.b16 %v159
    %v619 = vunpack.c.l.b16 %v160
    %v620 = vunpack.c.h.b16 %v160
    %v621 = vunpack.c.l.b16 %v161
    %v622 = vunpack.c.h.b16 %v161
    %v623 = vunpack.c.l.b16 %v162
    %v624 = vunpack.c.h.b16 %v162
    %v625 = vunpack.c.l.b16 %v163
    %v626 = vunpack.c.h.b16 %v163
    %v627 = vunpack.c.l.b16 %v164
    %v628 = vunpack.c.h.b16 %v164
    %v629 = vunpack.c.l.b16 %v165
    %v630 = vunpack.c.h.b16 %v165
    %v631 = vunpack.c.l.b16 %v166
    %v632 = vunpack.c.h.b16 %v166
    %v633 = vunpack.c.l.b16 %v167
    %v634 = vunpack.c.h.b16 %v167
    %v635 = vunpack.c.l.b16 %v168
    %v636 = vunpack.c.h.b16 %v168
    %v637 = vunpack.c.l.b16 %v169
    %v638 = vunpack.c.h.b16 %v169
    %v639 = vunpack.c.l.b16 %v170
    %v640 = vunpack.c.h.b16 %v170
    %v641 = vunpack.c.l.b16 %v171
    %v642 = vunpack.c.h.b16 %v171
    %v643 = vunpack.c.l.b16 %v172
    %v644 = vunpack.c.h.b16 %v172
    %v645 = vunpack.c.l.b16 %v173
    %v646 = vunpack.c.h.b16 %v173
    %v647 = vunpack.c.l.b16 %v174
    %v648 = vunpack.c.h.b16 %v174
    %v649 = vunpack.c.l.b16 %v175
    %v650 = vunpack.c.h.b16 %v175
    %v651 = vunpack.c.l.b16 %v176
    %v652 = vunpack.c.h.b16 %v176
    %v653 = vunpack.c.l.b16 %v177
    %v654 = vunpack.c.h.b16 %v177
    %v655 = vunpack.c.l.b16 %v178
    %v656 = vunpack.c.h.b16 %v178
    %v657 = vunpack.c.l.b16 %v179
    %v658 = vunpack.c.h.b16 %v179
    %v659 = vunpack.c.l.b16 %v180
    %v660 = vunpack.c.h.b16 %v180
    %v661 = vunpack.c.l.b16 %v181
    %v662 = vunpack.c.h.b16 %v181
    %v663 = vunpack.c.l.b16 %v182
    %v664 = vunpack.c.h.b16 %v182
    %v665 = vunpack.c.l.b16 %v183
    %v666 = vunpack.c.h.b16 %v183
    %v667 = vunpack.c.l.b16 %v184
    %v668 = vunpack.c.h.b16 %v184
    %v669 = vunpack.c.l.b16 %v185
    %v670 = vunpack.c.h.b16 %v185
    %v671 = vunpack.c.l.b16 %v186
    %v672 = vunpack.c.h.b16 %v186
    %v673 = vunpack.c.l.b16 %v187
    %v674 = vunpack.c.h.b16 %v187
    %v675 = vunpack.c.l.b16 %v188
    %v676 = vunpack.c.h.b16 %v188
    %v677 = vunpack.c.l.b16 %v189
    %v678 = vunpack.c.h.b16 %v189
    %v679 = vunpack.c.l.b16 %v190
    %v680 = vunpack.c.h.b16 %v190
    %v681 = vunpack.c.l.b16 %v191
    %v682 = vunpack.c.h.b16 %v191
    %v683 = vunpack.c.l.b16 %v192
    %v684 = vunpack.c.h.b16 %v192
    %v685 = vunpack.c.l.b16 %v193
    %v686 = vunpack.c.h.b16 %v193
    %v687 = vunpack.c.l.b16 %v194
    %v688 = vunpack.c.h.b16 %v194
    %v689 = vunpack.c.l.b16 %v195
    %v690 = vunpack.c.h.b16 %v195
    %v691 = vunpack.c.l.b16 %v196
    %v692 = vunpack.c.h.b16 %v196
    %v693 = vunpack.c.l.b16 %v197
    %v694 = vunpack.c.h.b16 %v197
    %v695 = vunpack.c.l.b16 %v198
    %v696 = vunpack.c.h.b16 %v198
    %v697 = vunpack.c.l.b16 %v199
    %v698 = vunpack.c.h.b16 %v199
    %v699 = vunpack.c.l.b16 %v200
    %v700 = vunpack.c.h.b16 %v200
    %v701 = vunpack.c.l.b16 %v201
    %v702 = vunpack.c.h.b16 %v201
    %v703 = vunpack.c.l.b16 %v202
    %v704 = vunpack.c.h.b16 %v202
    %v705 = vunpack.c.l.b16 %v203
    %v706 = vunpack.c.h.b16 %v203
    %v707 = vunpack.c.l.b16 %v204
    %v708 = vunpack.c.h.b16 %v204
    %v709 = vunpack.c.l.b16 %v205
    %v710 = vunpack.c.h.b16 %v205
    %v711 = vunpack.c.l.b16 %v206
    %v712 = vunpack.c.h.b16 %v206
    %v713 = vunpack.c.l.b16 %v207
    %v714 = vunpack.c.h.b16 %v207
    %v715 = vunpack.c.l.b16 %v208
    %v716 = vunpack.c.h.b16 %v208
    %v717 = vunpack.c.l.b16 %v209
    %v718 = vunpack.c.h.b16 %v209
    %v719 = vunpack.c.l.b16 %v210
    %v720 = vunpack.c.h.b16 %v210
    %v721 = vunpack.c.l.b16 %v211
    %v722 = vunpack.c.h.b16 %v211
    %v723 = vunpack.c.l.b16 %v212
    %v724 = vunpack.c.h.b16 %v212
    %v725 = vunpack.c.l.b16 %v213
    %v726 = vunpack.c.h.b16 %v213
    %v727 = vunpack.c.l.b16 %v214
    %v728 = vunpack.c.h.b16 %v214
    %v729 = vunpack.c.l.b16 %v215
    %v730 = vunpack.c.h.b16 %v215
    %v731 = vunpack.c.l.b16 %v216
    %v732 = vunpack.c.h.b16 %v216
    %v733 = vunpack.c.l.b16 %v217
    %v734 = vunpack.c.h.b16 %v217
    %v735 = vunpack.c.l.b16 %v218
    %v736 = vunpack.c.h.b16 %v218
    %v737 = vunpack.c.l.b16 %v219
    %v738 = vunpack.c.h.b16 %v219
    %v739 = vunpack.c.l.b16 %v220
    %v740 = vunpack.c.h.b16 %v220
    %v741 = vunpack.c.l.b16 %v221
    %v742 = vunpack.c.h.b16 %v221
    %v743 = vunpack.c.l.b16 %v222
    %v744 = vunpack.c.h.b16 %v222
    %v745 = vunpack.c.l.b16 %v223
    %v746 = vunpack.c.h.b16 %v223
    %v747 = vunpack.c.l.b16 %v224
    %v748 = vunpack.c.h.b16 %v224
    %v749 = vunpack.c.l.b16 %v225
    %v750 = vunpack.c.h.b16 %v225
    %v751 = vunpack.c.l.b16 %v226
    %v752 = vunpack.c.h.b16 %v226
    %v753 = vunpack.c.l.b16 %v227
    %v754 = vunpack.c.h.b16 %v227
    %v755 = vunpack.c.l.b16 %v228
    %v756 = vunpack.c.h.b16 %v228
    %v757 = vunpack.c.l.b16 %v229
    %v758 = vunpack.c.h.b16 %v229
    %v759 = vunpack.c.l.b16 %v230
    %v760 = vunpack.c.h.b16 %v230
    %v761 = vunpack.c.l.b16 %v231
    %v762 = vunpack.c.h.b16 %v231
    %v763 = vunpack.c.l.b16 %v232
    %v764 = vunpack.c.h.b16 %v232
    %v765 = vunpack.c.l.b16 %v233
    %v766 = vunpack.c.h.b16 %v233
    %v767 = vunpack.c.l.b16 %v234
    %v768 = vunpack.c.h.b16 %v234
    %v769 = vunpack.c.l.b16 %v235
    %v770 = vunpack.c.h.b16 %v235
    %v771 = vunpack.c.l.b16 %v236
    %v772 = vunpack.c.h.b16 %v236
    %v773 = vunpack.c.l.b16 %v237
    %v774 = vunpack.c.h.b16 %v237
    %v775 = vunpack.c.l.b16 %v238
    %v776 = vunpack.c.h.b16 %v238
    %v777 = vunpack.c.l.b16 %v239
    %v778 = vunpack.c.h.b16 %v239
    %v779 = vunpack.c.l.b16 %v240
    %v780 = vunpack.c.h.b16 %v240
    %v781 = vunpack.c.l.b16 %v241
    %v782 = vunpack.c.h.b16 %v241
    %v783 = vunpack.c.l.b16 %v242
    %v784 = vunpack.c.h.b16 %v242
    %v785 = vunpack.c.l.b16 %v243
    %v786 = vunpack.c.h.b16 %v243
    %v787 = vunpack.c.l.b16 %v244
    %v788 = vunpack.c.h.b16 %v244
    %v789 = vunpack.c.l.b16 %v245
    %v790 = vunpack.c.h.b16 %v245
    %v791 = vunpack.c.l.b16 %v246
    %v792 = vunpack.c.h.b16 %v246
    %v793 = vunpack.c.l.b16 %v247
    %v794 = vunpack.c.h.b16 %v247
    %v795 = vunpack.c.l.b16 %v248
    %v796 = vunpack.c.h.b16 %v248
    %v797 = vunpack.c.l.b16 %v249
    %v798 = vunpack.c.h.b16 %v249
    %v799 = vunpack.c.l.b16 %v250
    %v800 = vunpack.c.h.b16 %v250
    %v801 = vunpack.c.l.b16 %v251
    %v802 = vunpack.c.h.b16 %v251
    %v803 = vunpack.c.l.b16 %v252
    %v804 = vunpack.c.h.b16 %v252
    %v805 = vunpack.c.l.b16 %v253
    %v806 = vunpack.c.h.b16 %v253
    %v807 = vunpack.c.l.b16 %v254
    %v808 = vunpack.c.h.b16 %v254
    %v809 = vunpack.c.l.b16 %v255
    %v810 = vunpack.c.h.b16 %v255
    %v811 = vunpack.c.l.b16 %v256
    %v812 = vunpack.c.h.b16 %v256
    %v813 = vunpack.c.l.b16 %v257
    %v814 = vunpack.c.h.b16 %v257
    %v815 = vunpack.c.l.b16 %v258
    %v816 = vunpack.c.h.b16 %v258
    %v817 = vunpack.c.l.b16 %v259
    %v818 = vunpack.c.h.b16 %v259
    %v819 = vunpack.c.l.b16 %v260
    %v820 = vunpack.c.h.b16 %v260
    %v821 = vunpack.c.l.b16 %v261
    %v822 = vunpack.c.h.b16 %v261
    %v823 = vunpack.c.l.b16 %v262
    %v824 = vunpack.c.h.b16 %v262
    %v825 = vunpack.c.l.b16 %v263
    %v826 = vunpack.c.h.b16 %v263
    %v827 = vunpack.c.l.b16 %v264
    %v828 = vunpack.c.h.b16 %v264
    %v829 = vunpack.c.l.b16 %v265
    %v830 = vunpack.c.h.b16 %v265
    %v831 = vunpack.c.l.b16 %v266
    %v832 = vunpack.c.h.b16 %v266
    %v833 = vunpack.c.l.b16 %v267
    %v834 = vunpack.c.h.b16 %v267
    %v835 = vunpack.c.l.b16 %v268
    %v836 = vunpack.c.h.b16 %v268
    %v837 = vunpack.c.l.b16 %v269
    %v838 = vunpack.c.h.b16 %v269
    %v839 = vunpack.c.l.b16 %v270
    %v840 = vunpack.c.h.b16 %v270
    %v841 = vunpack.c.l.b16 %v271
    %v842 = vunpack.c.h.b16 %v271
    %v843 = vunpack.c.l.b16 %v272
    %v844 = vunpack.c.h.b16 %v272
    %v845 = vunpack.c.l.b16 %v273
    %v846 = vunpack.c.h.b16 %v273
    %v847 = vunpack.c.l.b16 %v274
    %v848 = vunpack.c.h.b16 %v274
    %v849 = vunpack.c.l.b16 %v275
    %v850 = vunpack.c.h.b16 %v275
    %v851 = vunpack.c.l.b16 %v276
    %v852 = vunpack.c.h.b16 %v276
    %v853 = vunpack.c.l.b16 %v277
    %v854 = vunpack.c.h.b16 %v277
    %v855 = vunpack.c.l.b16 %v278
    %v856 = vunpack.c.h.b16 %v278
    %v857 = vunpack.c.l.b16 %v279
    %v858 = vunpack.c.h.b16 %v279
    %v859 = vunpack.c.l.b16 %v280
    %v860 = vunpack.c.h.b16 %v280
    %v861 = vunpack.c.l.b16 %v281
    %v862 = vunpack.c.h.b16 %v281
    %v863 = vunpack.c.l.b16 %v282
    %v864 = vunpack.c.h.b16 %v282
    %v865 = vunpack.c.l.b16 %v283
    %v866 = vunpack.c.h.b16 %v283
    %v867 = vunpack.c.l.b16 %v284
    %v868 = vunpack.c.h.b16 %v284
    %v869 = vunpack.c.l.b16 %v285
    %v870 = vunpack.c.h.b16 %v285
    %v871 = vunpack.c.l.b16 %v286
    %v872 = vunpack.c.h.b16 %v286
    %v873 = vunpack.c.l.b16 %v287
    %v874 = vunpack.c.h.b16 %v287
    %v875 = vunpack.c.l.b16 %v288
    %v876 = vunpack.c.h.b16 %v288
    %v877 = vunpack.c.l.b16 %v289
    %v878 = vunpack.c.h.b16 %v289
    %v879 = vunpack.c.l.b16 %v290
    %v880 = vunpack.c.h.b16 %v290
    %v881 = vunpack.c.l.b16 %v291
    %v882 = vunpack.c.h.b16 %v291
    %v883 = vunpack.c.l.b16 %v292
    %v884 = vunpack.c.h.b16 %v292
    %v885 = vunpack.c.l.b16 %v293
    %v886 = vunpack.c.h.b16 %v293
    %v887 = vunpack.c.l.b16 %v294
    %v888 = vunpack.c.h.b16 %v294
    %v889 = vunpack.c.l.b16 %v295
    %v890 = vunpack.c.h.b16 %v295
    %v891 = vunpack.c.l.b16 %v296
    %v892 = vunpack.c.h.b16 %v296
    %v893 = vunpack.c.l.b16 %v297
    %v894 = vunpack.c.h.b16 %v297
    %v895 = vunpack.c.l.b16 %v298
    %v896 = vunpack.c.h.b16 %v298
    %v897 = vunpack.c.l.b16 %v299
    %v898 = vunpack.c.h.b16 %v299
    %v899 = vunpack.c.l.b16 %v300
    %v900 = vunpack.c.h.b16 %v300
    %v901 = vunpack.c.l.b16 %v301
    %v902 = vunpack.c.h.b16 %v301
    %v903 = vunpack.c.l.b16 %v302
    %v904 = vunpack.c.h.b16 %v302
    %v905 = vunpack.c.l.b16 %v303
    %v906 = vunpack.c.h.b16 %v303
    %v907 = vunpack.c.l.b16 %v304
    %v908 = vunpack.c.h.b16 %v304
    %v909 = vunpack.c.l.b16 %v305
    %v910 = vunpack.c.h.b16 %v305
    %v911 = vunpack.c.l.b16 %v306
    %v912 = vunpack.c.h.b16 %v306
    %v913 = vunpack.c.l.b16 %v307
    %v914 = vunpack.c.h.b16 %v307
    %v915 = vunpack.c.l.b16 %v308
    %v916 = vunpack.c.h.b16 %v308
    %v917 = vunpack.c.l.b16 %v309
    %v918 = vunpack.c.h.b16 %v309
    %v919 = vunpack.c.l.b16 %v310
    %v920 = vunpack.c.h.b16 %v310
    %v921 = vpack.c.b16 %v533, %v529
    %v922 = vpack.c.b16 %v534, %v530
    %v923 = vpack.c.b16 %v535, %v531
    %v924 = vpack.c.b16 %v536, %v532
    %v925 = vpack.c.b16 %v541, %v537
    %v926 = vpack.c.b16 %v542, %v538
    %v927 = vpack.c.b16 %v543, %v539
    %v928 = vpack.c.b16 %v544, %v540
    %v929 = vpack.c.b16 %v549, %v545
    %v930 = vpack.c.b16 %v550, %v546
    %v931 = vpack.c.b16 %v551, %v547
    %v932 = vpack.c.b16 %v552, %v548
    %v933 = vpack.c.b16 %v557, %v553
    %v934 = vpack.c.b16 %v558, %v554
    %v935 = vpack.c.b16 %v559, %v555
    %v936 = vpack.c.b16 %v560, %v556
    %v937 = vpack.c.b16 %v565, %v561
    %v938 = vpack.c.b16 %v566, %v562
    %v939 = vpack.c.b16 %v567, %v563
    %v940 = vpack.c.b16 %v568, %v564
    %v941 = vpack.c.b16 %v573, %v569
    %v942 = vpack.c.b16 %v574, %v570
    %v943 = vpack.c.b16 %v575, %v571
    %v944 = vpack.c.b16 %v576, %v572
    %v945 = vpack.c.b16 %v581, %v577
    %v946 = vpack.c.b16 %v582, %v578
    %v947 = vpack.c.b16 %v583, %v579
    %v948 = vpack.c.b16 %v584, %v580
    %v949 = vpack.c.b16 %v589, %v585
    %v950 = vpack.c.b16 %v590, %v586
    %v951 = vpack.c.b16 %v591, %v587
    %v952 = vpack.c.b16 %v592, %v588
    %v953 = vpack.c.b16 %v597, %v593
    %v954 = vpack.c.b16 %v598, %v594
    %v955 = vpack.c.b16 %v599, %v595
    %v956 = vpack.c.b16 %v600, %v596
    %v957 = vpack.c.b16 %v605, %v601
    %v958 = vpack.c.b16 %v606, %v602
    %v959 = vpack.c.b16 %v607, %v603
    %v960 = vpack.c.b16 %v608, %v604
    %v961 = vpack.c.b16 %v613, %v609
    %v962 = vpack.c.b16 %v614, %v610
    %v963 = vpack.c.b16 %v615, %v611
    %v964 = vpack.c.b16 %v616, %v612
    %v965 = vpack.c.b16 %v621, %v617
    %v966 = vpack.c.b16 %v622, %v618
    %v967 = vpack.c.b16 %v623, %v619
    %v968 = vpack.c.b16 %v624, %v620
    %v969 = vpack.c.b16 %v629, %v625
    %v970 = vpack.c.b16 %v630, %v626
    %v971 = vpack.c.b16 %v631, %v627
    %v972 = vpack.c.b16 %v632, %v628
    %v973 = vpack.c.b16 %v637, %v633
    %v974 = vpack.c.b16 %v638, %v634
    %v975 = vpack.c.b16 %v639, %v635
    %v976 = vpack.c.b16 %v640, %v636
    %v977 = vpack.c.b16 %v645, %v641
    %v978 = vpack.c.b16 %v646, %v642
    %v979 = vpack.c.b16 %v647, %v643
    %v980 = vpack.c.b16 %v648, %v644
    %v981 = vpack.c.b16 %v653, %v649
    %v982 = vpack.c.b16 %v654, %v650
    %v983 = vpack.c.b16 %v655, %v651
    %v984 = vpack.c.b16 %v656, %v652
    %v985 = vpack.c.b16 %v661, %v657
    %v986 = vpack.c.b16 %v662, %v658
    %v987 = vpack.c.b16 %v663, %v659
    %v988 = vpack.c.b16 %v664, %v660
    %v989 = vpack.c.b16 %v669, %v665
    %v990 = vpack.c.b16 %v670, %v666
    %v991 = vpack.c.b16 %v671, %v667
    %v992 = vpack.c.b16 %v672, %v668
    %v993 = vpack.c.b16 %v677, %v673
    %v994 = vpack.c.b16 %v678, %v674
    %v995 = vpack.c.b16 %v679, %v675
    %v996 = vpack.c.b16 %v680, %v676
    %v997 = vpack.c.b16 %v685, %v681
    %v998 = vpack.c.b16 %v686, %v682
    %v999 = vpack.c.b16 %v687, %v683
    %v1000 = vpack.c.b16 %v688, %v684
    %v1001 = vpack.c.b16 %v693, %v689
    %v1002 = vpack.c.b16 %v694, %v690
    %v1003 = vpack.c.b16 %v695, %v691
    %v1004 = vpack.c.b16 %v696, %v692
    %v1005 = vpack.c.b16 %v701, %v697
    %v1006 = vpack.c.b16 %v702, %v698
    %v1007 = vpack.c.b16 %v703, %v699
    %v1008 = vpack.c.b16 %v704, %v700
    %v1009 = vpack.c.b16 %v709, %v705
    %v1010 = vpack.c.b16 %v710, %v706
    %v1011 = vpack.c.b16 %v711, %v707
    %v1012 = vpack.c.b16 %v712, %v708
    %v1013 = vpack.c.b16 %v717, %v713
    %v1014 = vpack.c.b16 %v718, %v714
    %v1015 = vpack.c.b16 %v719, %v715
    %v1016 = vpack.c.b16 %v720, %v716
    %v1017 = vpack.c.b16 %v725, %v721
    %v1018 = vpack.c.b16 %v726, %v722
    %v1019 = vpack.c.b16 %v727, %v723
    %v1020 = vpack.c.b16 %v728, %v724
    %v1021 = vpack.c.b16 %v733, %v729
    %v1022 = vpack.c.b16 %v734, %v730
    %v1023 = vpack.c.b16 %v735, %v731
    %v1024 = vpack.c.b16 %v736, %v732
    %v1025 = vpack.c.b16 %v741, %v737
    %v1026 = vpack.c.b16 %v742, %v738
    %v1027 = vpack.c.b16 %v743, %v739
    %v1028 = vpack.c.b16 %v744, %v740
    %v1029 = vpack.c.b16 %v749, %v745
    %v1030 = vpack.c.b16 %v750, %v746
    %v1031 = vpack.c.b16 %v751, %v747
    %v1032 = vpack.c.b16 %v752, %v748
    %v1033 = vpack.c.b16 %v757, %v753
    %v1034 = vpack.c.b16 %v758, %v754
    %v1035 = vpack.c.b16 %v759, %v755
    %v1036 = vpack.c.b16 %v760, %v756
    %v1037 = vpack.c.b16 %v765, %v761
    %v1038 = vpack.c.b16 %v766, %v762
    %v1039 = vpack.c.b16 %v767, %v763
    %v1040 = vpack.c.b16 %v768, %v764
    %v1041 = vpack.c.b16 %v773, %v769
    %v1042 = vpack.c.b16 %v774, %v770
    %v1043 = vpack.c.b16 %v775, %v771
    %v1044 = vpack.c.b16 %v776, %v772
    %v1045 = vpack.c.b16 %v781, %v777
    %v1046 = vpack.c.b16 %v782, %v778
    %v1047 = vpack.c.b16 %v783, %v779
    %v1048 = vpack.c.b16 %v784, %v780
    %v1049 = vpack.c.b16 %v789, %v785
    %v1050 = vpack.c.b16 %v790, %v786
    %v1051 = vpack.c.b16 %v791, %v787
    %v1052 = vpack.c.b16 %v792, %v788
    %v1053 = vpack.c.b16 %v797, %v793
    %v1054 = vpack.c.b16 %v798, %v794
    %v1055 = vpack.c.b16 %v799, %v795
    %v1056 = vpack.c.b16 %v800, %v796
    %v1057 = vpack.c.b16 %v805, %v801
    %v1058 = vpack.c.b16 %v806, %v802
    %v1059 = vpack.c.b16 %v807, %v803
    %v1060 = vpack.c.b16 %v808, %v804
    %v1061 = vpack.c.b16 %v813, %v809
    %v1062 = vpack.c.b16 %v814, %v810
    %v1063 = vpack.c.b16 %v815, %v811
    %v1064 = vpack.c.b16 %v816, %v812
    %v1065 = vpack.c.b16 %v821, %v817
    %v1066 = vpack.c.b16 %v822, %v818
    %v1067 = vpack.c.b16 %v823, %v819
    %v1068 = vpack.c.b16 %v824, %v820
    %v1069 = vpack.c.b16 %v829, %v825
    %v1070 = vpack.c.b16 %v830, %v826
    %v1071 = vpack.c.b16 %v831, %v827
    %v1072 = vpack.c.b16 %v832, %v828
    %v1073 = vpack.c.b16 %v837, %v833
    %v1074 = vpack.c.b16 %v838, %v834
    %v1075 = vpack.c.b16 %v839, %v835
    %v1076 = vpack.c.b16 %v840, %v836
    %v1077 = vpack.c.b16 %v845, %v841
    %v1078 = vpack.c.b16 %v846, %v842
    %v1079 = vpack.c.b16 %v847, %v843
    %v1080 = vpack.c.b16 %v848, %v844
    %v1081 = vpack.c.b16 %v853, %v849
    %v1082 = vpack.c.b16 %v854, %v850
    %v1083 = vpack.c.b16 %v855, %v851
    %v1084 = vpack.c.b16 %v856, %v852
    %v1085 = vpack.c.b16 %v861, %v857
    %v1086 = vpack.c.b16 %v862, %v858
    %v1087 = vpack.c.b16 %v863, %v859
    %v1088 = vpack.c.b16 %v864, %v860
    %v1089 = vpack.c.b16 %v869, %v865
    %v1090 = vpack.c.b16 %v870, %v866
    %v1091 = vpack.c.b16 %v871, %v867
    %v1092 = vpack.c.b16 %v872, %v868
    %v1093 = vpack.c.b16 %v877, %v873
    %v1094 = vpack.c.b16 %v878, %v874
    %v1095 = vpack.c.b16 %v879, %v875
    %v1096 = vpack.c.b16 %v880, %v876
    %v1097 = vpack.c.b16 %v885, %v881
    %v1098 = vpack.c.b16 %v886, %v882
    %v1099 = vpack.c.b16 %v887, %v883
    %v1100 = vpack.c.b16 %v888, %v884
    %v1101 = vpack.c.b16 %v893, %v889
    %v1102 = vpack.c.b16 %v894, %v890
    %v1103 = vpack.c.b16 %v895, %v891
    %v1104 = vpack.c.b16 %v896, %v892
    %v1105 = vpack.c.b16 %v901, %v897
    %v1106 = vpack.c.b16 %v902, %v898
    %v1107 = vpack.c.b16 %v903, %v899
    %v1108 = vpack.c.b16 %v904, %v900
    %v1109 = vpack.c.b16 %v909, %v905
    %v1110 = vpack.c.b16 %v910, %v906
    %v1111 = vpack.c.b16 %v911, %v907
    %v1112 = vpack.c.b16 %v912, %v908
    %v1113 = vpack.c.b16 %v917, %v913
    %v1114 = vpack.c.b16 %v918, %v914
    %v1115 = vpack.c.b16 %v919, %v915
    %v1116 = vpack.c.b16 %v920, %v916
    %vm1313 = vcmask 130048
    %v1315 = vsel %vm1313, %v114, 0
    %1317 = vmatprep.subr.bf16.mxu0 %v950
    %1318 = vmatpush1.bf16.msra.mxu0 %v949
    %1319 = vmatprep.subr.bf16.mxu0 %v946
    %1320 = vmatpush1.bf16.msra.mxu0 %v945
    %1321 = vmatprep.subr.bf16.mxu0 %v942
    %1322 = vmatpush1.bf16.msra.mxu0 %v941
    %1323 = vmatprep.subr.bf16.mxu0 %v938
    %1324 = vmatpush1.bf16.msra.mxu0 %v937
    %1325 = vmatprep.subr.bf16.mxu0 %v934
    %1326 = vmatpush1.bf16.msra.mxu0 %v933
    %1327 = vmatprep.subr.bf16.mxu0 %v930
    %1328 = vmatpush1.bf16.msra.mxu0 %v929
    %1329 = vmatprep.subr.bf16.mxu0 %v926
    %1330 = vmatpush1.bf16.msra.mxu0 %v925
    %1331 = vmatprep.subr.bf16.mxu0 %v922
    %1332 = vmatpush1.bf16.msra.mxu0 %v921
    %1333 = vmatprep.subr.bf16.mxu0 %v982
    %1334 = vmatpush2.bf16.msra.mxu0 %v981
    %1335 = vmatprep.subr.bf16.mxu0 %v978
    %1336 = vmatpush2.bf16.msra.mxu0 %v977
    %1337 = vmatprep.subr.bf16.mxu0 %v974
    %1338 = vmatpush2.bf16.msra.mxu0 %v973
    %1339 = vmatprep.subr.bf16.mxu0 %v970
    %1340 = vmatpush2.bf16.msra.mxu0 %v969
    %1341 = vmatprep.subr.bf16.mxu0 %v966
    %1342 = vmatpush2.bf16.msra.mxu0 %v965
    %1343 = vmatprep.subr.bf16.mxu0 %v962
    %1344 = vmatpush2.bf16.msra.mxu0 %v961
    %1345 = vmatprep.subr.bf16.mxu0 %v958
    %1346 = vmatpush2.bf16.msra.mxu0 %v957
    %1347 = vmatprep.subr.bf16.mxu0 %v954
    %1348 = vmatpush2.bf16.msra.mxu0 %v953
    %1349 = vmatprep.mubr.bf16.mxu0 %v109
    %1350 = vmatmul.mubr.bf16.gmra.mxu0 %v108
    %v1351 = vpop.f32.mrf.mxu0
    %v1352 = vadd.f32 %v316, %v1351
    %v1353 = vpop.f32.mrf.mxu0
    %v1354 = vadd.f32 %v320, %v1353
    %v1355 = vpop.f32.mrf.mxu0
    %v1356 = vadd.f32 %v316, %v1355
    %v1357 = vpop.f32.mrf.mxu0
    %v1358 = vadd.f32 %v320, %v1357
    %1359 = vdwg.mxu0
    %1360 = vmatprep.subr.bf16.mxu0 %v1014
    %1361 = vmatpush1.bf16.msra.mxu0 %v1013
    %1362 = vmatprep.subr.bf16.mxu0 %v1010
    %1363 = vmatpush1.bf16.msra.mxu0 %v1009
    %1364 = vmatprep.subr.bf16.mxu0 %v1006
    %1365 = vmatpush1.bf16.msra.mxu0 %v1005
    %1366 = vmatprep.subr.bf16.mxu0 %v1002
    %1367 = vmatpush1.bf16.msra.mxu0 %v1001
    %1368 = vmatprep.subr.bf16.mxu0 %v998
    %1369 = vmatpush1.bf16.msra.mxu0 %v997
    %1370 = vmatprep.subr.bf16.mxu0 %v994
    %1371 = vmatpush1.bf16.msra.mxu0 %v993
    %1372 = vmatprep.subr.bf16.mxu0 %v990
    %1373 = vmatpush1.bf16.msra.mxu0 %v989
    %1374 = vmatprep.subr.bf16.mxu0 %v986
    %1375 = vmatpush1.bf16.msra.mxu0 %v985
    %1376 = vmatprep.subr.bf16.mxu0 %v1046
    %1377 = vmatpush2.bf16.msra.mxu0 %v1045
    %1378 = vmatprep.subr.bf16.mxu0 %v1042
    %1379 = vmatpush2.bf16.msra.mxu0 %v1041
    %1380 = vmatprep.subr.bf16.mxu0 %v1038
    %1381 = vmatpush2.bf16.msra.mxu0 %v1037
    %1382 = vmatprep.subr.bf16.mxu0 %v1034
    %1383 = vmatpush2.bf16.msra.mxu0 %v1033
    %1384 = vmatprep.subr.bf16.mxu0 %v1030
    %1385 = vmatpush2.bf16.msra.mxu0 %v1029
    %1386 = vmatprep.subr.bf16.mxu0 %v1026
    %1387 = vmatpush2.bf16.msra.mxu0 %v1025
    %1388 = vmatprep.subr.bf16.mxu0 %v1022
    %1389 = vmatpush2.bf16.msra.mxu0 %v1021
    %1390 = vmatprep.subr.bf16.mxu0 %v1018
    %1391 = vmatpush2.bf16.msra.mxu0 %v1017
    %1392 = vmatprep.mubr.bf16.mxu0 %v111
    %1393 = vmatmul.mubr.bf16.gmra.mxu0 %v110
    %v1394 = vpop.f32.mrf.mxu0
    %v1395 = vadd.f32 %v1352, %v1394
    %v1396 = vpop.f32.mrf.mxu0
    %v1397 = vadd.f32 %v1354, %v1396
    %v1398 = vpop.f32.mrf.mxu0
    %v1399 = vadd.f32 %v1356, %v1398
    %v1400 = vpop.f32.mrf.mxu0
    %v1401 = vadd.f32 %v1358, %v1400
    %1402 = vdwg.mxu0
    %1403 = vmatprep.subr.bf16.mxu0 %v1078
    %1404 = vmatpush1.bf16.msra.mxu0 %v1077
    %1405 = vmatprep.subr.bf16.mxu0 %v1074
    %1406 = vmatpush1.bf16.msra.mxu0 %v1073
    %1407 = vmatprep.subr.bf16.mxu0 %v1070
    %1408 = vmatpush1.bf16.msra.mxu0 %v1069
    %1409 = vmatprep.subr.bf16.mxu0 %v1066
    %1410 = vmatpush1.bf16.msra.mxu0 %v1065
    %1411 = vmatprep.subr.bf16.mxu0 %v1062
    %1412 = vmatpush1.bf16.msra.mxu0 %v1061
    %1413 = vmatprep.subr.bf16.mxu0 %v1058
    %1414 = vmatpush1.bf16.msra.mxu0 %v1057
    %1415 = vmatprep.subr.bf16.mxu0 %v1054
    %1416 = vmatpush1.bf16.msra.mxu0 %v1053
    %1417 = vmatprep.subr.bf16.mxu0 %v1050
    %1418 = vmatpush1.bf16.msra.mxu0 %v1049
    %1419 = vmatprep.subr.bf16.mxu0 %v1110
    %1420 = vmatpush2.bf16.msra.mxu0 %v1109
    %1421 = vmatprep.subr.bf16.mxu0 %v1106
    %1422 = vmatpush2.bf16.msra.mxu0 %v1105
    %1423 = vmatprep.subr.bf16.mxu0 %v1102
    %1424 = vmatpush2.bf16.msra.mxu0 %v1101
    %1425 = vmatprep.subr.bf16.mxu0 %v1098
    %1426 = vmatpush2.bf16.msra.mxu0 %v1097
    %1427 = vmatprep.subr.bf16.mxu0 %v1094
    %1428 = vmatpush2.bf16.msra.mxu0 %v1093
    %1429 = vmatprep.subr.bf16.mxu0 %v1090
    %1430 = vmatpush2.bf16.msra.mxu0 %v1089
    %1431 = vmatprep.subr.bf16.mxu0 %v1086
    %1432 = vmatpush2.bf16.msra.mxu0 %v1085
    %1433 = vmatprep.subr.bf16.mxu0 %v1082
    %1434 = vmatpush2.bf16.msra.mxu0 %v1081
    %1435 = vmatprep.mubr.bf16.mxu0 %v113
    %1436 = vmatmul.mubr.bf16.gmra.mxu0 %v112
    %v1437 = vpop.f32.mrf.mxu0
    %v1438 = vadd.f32 %v1395, %v1437
    %v1439 = vpop.f32.mrf.mxu0
    %v1440 = vadd.f32 %v1397, %v1439
    %v1441 = vpop.f32.mrf.mxu0
    %v1442 = vadd.f32 %v1399, %v1441
    %v1443 = vpop.f32.mrf.mxu0
    %v1444 = vadd.f32 %v1401, %v1443
    %1445 = vdwg.mxu0
    %1446 = vmatprep.subr.bf16.mxu0 0
    %1447 = vmatpush1.bf16.msra.mxu0 0
    %1448 = vmatprep.subr.bf16.mxu0 0
    %1449 = vmatpush1.bf16.msra.mxu0 0
    %1450 = vmatprep.subr.bf16.mxu0 0
    %1451 = vmatpush1.bf16.msra.mxu0 0
    %1452 = vmatprep.subr.bf16.mxu0 0
    %1453 = vmatpush1.bf16.msra.mxu0 0
    %1454 = vmatprep.subr.bf16.mxu0 0
    %1455 = vmatpush1.bf16.msra.mxu0 0
    %1456 = vmatprep.subr.bf16.mxu0 0
    %1457 = vmatpush1.bf16.msra.mxu0 0
    %1458 = vmatprep.subr.bf16.mxu0 0
    %1459 = vmatpush1.bf16.msra.mxu0 0
    %1460 = vmatprep.subr.bf16.mxu0 %v1114
    %1461 = vmatpush1.bf16.msra.mxu0 %v1113
    %1462 = vmatprep.subr.bf16.mxu0 0
    %1463 = vmatpush2.bf16.msra.mxu0 0
    %1464 = vmatprep.subr.bf16.mxu0 0
    %1465 = vmatpush2.bf16.msra.mxu0 0
    %1466 = vmatprep.subr.bf16.mxu0 0
    %1467 = vmatpush2.bf16.msra.mxu0 0
    %1468 = vmatprep.subr.bf16.mxu0 0
    %1469 = vmatpush2.bf16.msra.mxu0 0
    %1470 = vmatprep.subr.bf16.mxu0 0
    %1471 = vmatpush2.bf16.msra.mxu0 0
    %1472 = vmatprep.subr.bf16.mxu0 0
    %1473 = vmatpush2.bf16.msra.mxu0 0
    %1474 = vmatprep.subr.bf16.mxu0 0
    %1475 = vmatpush2.bf16.msra.mxu0 0
    %1476 = vmatprep.subr.bf16.mxu0 0
    %1477 = vmatpush2.bf16.msra.mxu0 0
    %1478 = vmatprep.mubr.bf16.mxu0 0
    %1479 = vmatmul.mubr.bf16.gmra.mxu0 %v1315
    %v1480 = vpop.f32.mrf.mxu0
    %v1481 = vadd.f32 %v1438, %v1480
    %v1482 = vpop.f32.mrf.mxu0
    %v1483 = vadd.f32 %v1440, %v1482
    %v1484 = vpop.f32.mrf.mxu0
    %v1485 = vadd.f32 %v1442, %v1484
    %v1486 = vpop.f32.mrf.mxu0
    %v1487 = vadd.f32 %v1444, %v1486
    %1488 = vdwg.mxu0
    %1489 = vmatprep.subr.bf16.mxu0 %v952
    %1490 = vmatpush1.bf16.msra.mxu0 %v951
    %1491 = vmatprep.subr.bf16.mxu0 %v948
    %1492 = vmatpush1.bf16.msra.mxu0 %v947
    %1493 = vmatprep.subr.bf16.mxu0 %v944
    %1494 = vmatpush1.bf16.msra.mxu0 %v943
    %1495 = vmatprep.subr.bf16.mxu0 %v940
    %1496 = vmatpush1.bf16.msra.mxu0 %v939
    %1497 = vmatprep.subr.bf16.mxu0 %v936
    %1498 = vmatpush1.bf16.msra.mxu0 %v935
    %1499 = vmatprep.subr.bf16.mxu0 %v932
    %1500 = vmatpush1.bf16.msra.mxu0 %v931
    %1501 = vmatprep.subr.bf16.mxu0 %v928
    %1502 = vmatpush1.bf16.msra.mxu0 %v927
    %1503 = vmatprep.subr.bf16.mxu0 %v924
    %1504 = vmatpush1.bf16.msra.mxu0 %v923
    %1505 = vmatprep.subr.bf16.mxu0 %v984
    %1506 = vmatpush2.bf16.msra.mxu0 %v983
    %1507 = vmatprep.subr.bf16.mxu0 %v980
    %1508 = vmatpush2.bf16.msra.mxu0 %v979
    %1509 = vmatprep.subr.bf16.mxu0 %v976
    %1510 = vmatpush2.bf16.msra.mxu0 %v975
    %1511 = vmatprep.subr.bf16.mxu0 %v972
    %1512 = vmatpush2.bf16.msra.mxu0 %v971
    %1513 = vmatprep.subr.bf16.mxu0 %v968
    %1514 = vmatpush2.bf16.msra.mxu0 %v967
    %1515 = vmatprep.subr.bf16.mxu0 %v964
    %1516 = vmatpush2.bf16.msra.mxu0 %v963
    %1517 = vmatprep.subr.bf16.mxu0 %v960
    %1518 = vmatpush2.bf16.msra.mxu0 %v959
    %1519 = vmatprep.subr.bf16.mxu0 %v956
    %1520 = vmatpush2.bf16.msra.mxu0 %v955
    %1521 = vmatprep.mubr.bf16.mxu0 %v109
    %1522 = vmatmul.mubr.bf16.gmra.mxu0 %v108
    %v1523 = vpop.f32.mrf.mxu0
    %v1524 = vadd.f32 %v324, %v1523
    %v1525 = vpop.f32.mrf.mxu0
    %v1526 = vadd.f32 %v328, %v1525
    %v1527 = vpop.f32.mrf.mxu0
    %v1528 = vadd.f32 %v324, %v1527
    %v1529 = vpop.f32.mrf.mxu0
    %v1530 = vadd.f32 %v328, %v1529
    %1531 = vdwg.mxu0
    %1532 = vmatprep.subr.bf16.mxu0 %v1016
    %1533 = vmatpush1.bf16.msra.mxu0 %v1015
    %1534 = vmatprep.subr.bf16.mxu0 %v1012
    %1535 = vmatpush1.bf16.msra.mxu0 %v1011
    %1536 = vmatprep.subr.bf16.mxu0 %v1008
    %1537 = vmatpush1.bf16.msra.mxu0 %v1007
    %1538 = vmatprep.subr.bf16.mxu0 %v1004
    %1539 = vmatpush1.bf16.msra.mxu0 %v1003
    %1540 = vmatprep.subr.bf16.mxu0 %v1000
    %1541 = vmatpush1.bf16.msra.mxu0 %v999
    %1542 = vmatprep.subr.bf16.mxu0 %v996
    %1543 = vmatpush1.bf16.msra.mxu0 %v995
    %1544 = vmatprep.subr.bf16.mxu0 %v992
    %1545 = vmatpush1.bf16.msra.mxu0 %v991
    %1546 = vmatprep.subr.bf16.mxu0 %v988
    %1547 = vmatpush1.bf16.msra.mxu0 %v987
    %1548 = vmatprep.subr.bf16.mxu0 %v1048
    %1549 = vmatpush2.bf16.msra.mxu0 %v1047
    %1550 = vmatprep.subr.bf16.mxu0 %v1044
    %1551 = vmatpush2.bf16.msra.mxu0 %v1043
    %1552 = vmatprep.subr.bf16.mxu0 %v1040
    %1553 = vmatpush2.bf16.msra.mxu0 %v1039
    %1554 = vmatprep.subr.bf16.mxu0 %v1036
    %1555 = vmatpush2.bf16.msra.mxu0 %v1035
    %1556 = vmatprep.subr.bf16.mxu0 %v1032
    %1557 = vmatpush2.bf16.msra.mxu0 %v1031
    %1558 = vmatprep.subr.bf16.mxu0 %v1028
    %1559 = vmatpush2.bf16.msra.mxu0 %v1027
    %1560 = vmatprep.subr.bf16.mxu0 %v1024
    %1561 = vmatpush2.bf16.msra.mxu0 %v1023
    %1562 = vmatprep.subr.bf16.mxu0 %v1020
    %1563 = vmatpush2.bf16.msra.mxu0 %v1019
    %1564 = vmatprep.mubr.bf16.mxu0 %v111
    %1565 = vmatmul.mubr.bf16.gmra.mxu0 %v110
    %v1566 = vpop.f32.mrf.mxu0
    %v1567 = vadd.f32 %v1524, %v1566
    %v1568 = vpop.f32.mrf.mxu0
    %v1569 = vadd.f32 %v1526, %v1568
    %v1570 = vpop.f32.mrf.mxu0
    %v1571 = vadd.f32 %v1528, %v1570
    %v1572 = vpop.f32.mrf.mxu0
    %v1573 = vadd.f32 %v1530, %v1572
    %1574 = vdwg.mxu0
    %1575 = vmatprep.subr.bf16.mxu0 %v1080
    %1576 = vmatpush1.bf16.msra.mxu0 %v1079
    %1577 = vmatprep.subr.bf16.mxu0 %v1076
    %1578 = vmatpush1.bf16.msra.mxu0 %v1075
    %1579 = vmatprep.subr.bf16.mxu0 %v1072
    %1580 = vmatpush1.bf16.msra.mxu0 %v1071
    %1581 = vmatprep.subr.bf16.mxu0 %v1068
    %1582 = vmatpush1.bf16.msra.mxu0 %v1067
    %1583 = vmatprep.subr.bf16.mxu0 %v1064
    %1584 = vmatpush1.bf16.msra.mxu0 %v1063
    %1585 = vmatprep.subr.bf16.mxu0 %v1060
    %1586 = vmatpush1.bf16.msra.mxu0 %v1059
    %1587 = vmatprep.subr.bf16.mxu0 %v1056
    %1588 = vmatpush1.bf16.msra.mxu0 %v1055
    %1589 = vmatprep.subr.bf16.mxu0 %v1052
    %1590 = vmatpush1.bf16.msra.mxu0 %v1051
    %1591 = vmatprep.subr.bf16.mxu0 %v1112
    %1592 = vmatpush2.bf16.msra.mxu0 %v1111
    %1593 = vmatprep.subr.bf16.mxu0 %v1108
    %1594 = vmatpush2.bf16.msra.mxu0 %v1107
    %1595 = vmatprep.subr.bf16.mxu0 %v1104
    %1596 = vmatpush2.bf16.msra.mxu0 %v1103
    %1597 = vmatprep.subr.bf16.mxu0 %v1100
    %1598 = vmatpush2.bf16.msra.mxu0 %v1099
    %1599 = vmatprep.subr.bf16.mxu0 %v1096
    %1600 = vmatpush2.bf16.msra.mxu0 %v1095
    %1601 = vmatprep.subr.bf16.mxu0 %v1092
    %1602 = vmatpush2.bf16.msra.mxu0 %v1091
    %1603 = vmatprep.subr.bf16.mxu0 %v1088
    %1604 = vmatpush2.bf16.msra.mxu0 %v1087
    %1605 = vmatprep.subr.bf16.mxu0 %v1084
    %1606 = vmatpush2.bf16.msra.mxu0 %v1083
    %1607 = vmatprep.mubr.bf16.mxu0 %v113
    %1608 = vmatmul.mubr.bf16.gmra.mxu0 %v112
    %v1609 = vpop.f32.mrf.mxu0
    %v1610 = vadd.f32 %v1567, %v1609
    %v1611 = vpop.f32.mrf.mxu0
    %v1612 = vadd.f32 %v1569, %v1611
    %v1613 = vpop.f32.mrf.mxu0
    %v1614 = vadd.f32 %v1571, %v1613
    %v1615 = vpop.f32.mrf.mxu0
    %v1616 = vadd.f32 %v1573, %v1615
    %1617 = vdwg.mxu0
    %1618 = vmatprep.subr.bf16.mxu0 0
    %1619 = vmatpush1.bf16.msra.mxu0 0
    %1620 = vmatprep.subr.bf16.mxu0 0
    %1621 = vmatpush1.bf16.msra.mxu0 0
    %1622 = vmatprep.subr.bf16.mxu0 0
    %1623 = vmatpush1.bf16.msra.mxu0 0
    %1624 = vmatprep.subr.bf16.mxu0 0
    %1625 = vmatpush1.bf16.msra.mxu0 0
    %1626 = vmatprep.subr.bf16.mxu0 0
    %1627 = vmatpush1.bf16.msra.mxu0 0
    %1628 = vmatprep.subr.bf16.mxu0 0
    %1629 = vmatpush1.bf16.msra.mxu0 0
    %1630 = vmatprep.subr.bf16.mxu0 0
    %1631 = vmatpush1.bf16.msra.mxu0 0
    %1632 = vmatprep.subr.bf16.mxu0 %v1116
    %1633 = vmatpush1.bf16.msra.mxu0 %v1115
    %1634 = vmatprep.subr.bf16.mxu0 0
    %1635 = vmatpush2.bf16.msra.mxu0 0
    %1636 = vmatprep.subr.bf16.mxu0 0
    %1637 = vmatpush2.bf16.msra.mxu0 0
    %1638 = vmatprep.subr.bf16.mxu0 0
    %1639 = vmatpush2.bf16.msra.mxu0 0
    %1640 = vmatprep.subr.bf16.mxu0 0
    %1641 = vmatpush2.bf16.msra.mxu0 0
    %1642 = vmatprep.subr.bf16.mxu0 0
    %1643 = vmatpush2.bf16.msra.mxu0 0
    %1644 = vmatprep.subr.bf16.mxu0 0
    %1645 = vmatpush2.bf16.msra.mxu0 0
    %1646 = vmatprep.subr.bf16.mxu0 0
    %1647 = vmatpush2.bf16.msra.mxu0 0
    %1648 = vmatprep.subr.bf16.mxu0 0
    %1649 = vmatpush2.bf16.msra.mxu0 0
    %1650 = vmatprep.mubr.bf16.mxu0 0
    %1651 = vmatmul.mubr.bf16.gmra.mxu0 %v1315
    %v1652 = vpop.f32.mrf.mxu0
    %v1653 = vadd.f32 %v1610, %v1652
    %v1654 = vpop.f32.mrf.mxu0
    %v1655 = vadd.f32 %v1612, %v1654
    %v1656 = vpop.f32.mrf.mxu0
    %v1657 = vadd.f32 %v1614, %v1656
    %v1658 = vpop.f32.mrf.mxu0
    %v1659 = vadd.f32 %v1616, %v1658
    %1660 = vdwg.mxu0
    %v1661 = vmax.f32 %v1481, 0.0
    %v1662 = vmax.f32 %v1483, 0.0
    %v1663 = vmax.f32 %v1653, 0.0
    %v1664 = vmax.f32 %v1655, 0.0
    %v1665 = vmax.f32 %v1485, 0.0
    %v1666 = vmax.f32 %v1487, 0.0
    %v1667 = vmax.f32 %v1657, 0.0
    %v1668 = vmax.f32 %v1659, 0.0
    %v1669 = vpack.c.bf16 %v1665, %v1661
    %v1670 = vpack.c.bf16 %v1666, %v1662
    %v1671 = vpack.c.bf16 %v1667, %v1663
    %v1672 = vpack.c.bf16 %v1668, %v1664
    %v1673 = vld [vmem:[#allocation8] sm:$0xff]
    %v1674 = vld [vmem:[#allocation8 + $0x8] sm:$0xff]
    %v1675 = vld [vmem:[#allocation8 + $0x10] sm:$0xff]
    %v1676 = vld [vmem:[#allocation8 + $0x18] sm:$0xff]
    %v1677 = vld [vmem:[#allocation8 + $0x20] sm:$0xff]
    %v1678 = vld [vmem:[#allocation8 + $0x28] sm:$0xff]
    %v1679 = vld [vmem:[#allocation8 + $0x30] sm:$0xff]
    %v1680 = vld [vmem:[#allocation8 + $0x38] sm:$0xff]
    %v1681 = vld [vmem:[#allocation8 + $0x40] sm:$0xff]
    %v1682 = vld [vmem:[#allocation8 + $0x48] sm:$0xff]
    %v1683 = vld [vmem:[#allocation8 + $0x50] sm:$0xff]
    %v1684 = vld [vmem:[#allocation8 + $0x58] sm:$0xff]
    %v1685 = vld [vmem:[#allocation8 + $0x60] sm:$0xff]
    %v1686 = vld [vmem:[#allocation8 + $0x68] sm:$0xff]
    %v1687 = vld [vmem:[#allocation8 + $0x70] sm:$0xff]
    %v1688 = vld [vmem:[#allocation8 + $0x78] sm:$0xff]
    %v1689 = vld [vmem:[#allocation8 + $0x80] sm:$0xff]
    %v1690 = vld [vmem:[#allocation8 + $0x88] sm:$0xff]
    %v1691 = vld [vmem:[#allocation8 + $0x90] sm:$0xff]
    %v1692 = vld [vmem:[#allocation8 + $0x98] sm:$0xff]
    %v1693 = vld [vmem:[#allocation8 + $0xa0] sm:$0xff]
    %v1694 = vld [vmem:[#allocation8 + $0xa8] sm:$0xff]
    %v1695 = vld [vmem:[#allocation8 + $0xb0] sm:$0xff]
    %v1696 = vld [vmem:[#allocation8 + $0xb8] sm:$0xff]
    %v1697 = vld [vmem:[#allocation8 + $0xc0] sm:$0xff]
    %v1698 = vld [vmem:[#allocation8 + $0xc8] sm:$0xff]
    %v1699 = vld [vmem:[#allocation8 + $0xd0] sm:$0xff]
    %v1700 = vld [vmem:[#allocation8 + $0xd8] sm:$0xff]
    %v1701 = vld [vmem:[#allocation8 + $0xe0] sm:$0xff]
    %v1702 = vld [vmem:[#allocation8 + $0xe8] sm:$0xff]
    %v1703 = vld [vmem:[#allocation8 + $0xf0] sm:$0xff]
    %v1704 = vld [vmem:[#allocation8 + $0xf8] sm:$0xff]
    %v1705 = vld [vmem:[#allocation8 + $0x100] sm:$0xff]
    %v1706 = vld [vmem:[#allocation8 + $0x108] sm:$0xff]
    %v1707 = vld [vmem:[#allocation8 + $0x110] sm:$0xff]
    %v1708 = vld [vmem:[#allocation8 + $0x118] sm:$0xff]
    %v1709 = vld [vmem:[#allocation8 + $0x120] sm:$0xff]
    %v1710 = vld [vmem:[#allocation8 + $0x128] sm:$0xff]
    %v1711 = vld [vmem:[#allocation8 + $0x130] sm:$0xff]
    %v1712 = vld [vmem:[#allocation8 + $0x138] sm:$0xff]
    %v1713 = vld [vmem:[#allocation8 + $0x140] sm:$0xff]
    %v1714 = vld [vmem:[#allocation8 + $0x148] sm:$0xff]
    %v1715 = vld [vmem:[#allocation8 + $0x150] sm:$0xff]
    %v1716 = vld [vmem:[#allocation8 + $0x158] sm:$0xff]
    %v1717 = vld [vmem:[#allocation8 + $0x160] sm:$0xff]
    %v1718 = vld [vmem:[#allocation8 + $0x168] sm:$0xff]
    %v1719 = vld [vmem:[#allocation8 + $0x170] sm:$0xff]
    %v1720 = vld [vmem:[#allocation8 + $0x178] sm:$0xff]
    %v1721 = vld [vmem:[#allocation8 + $0x180] sm:$0xff]
    %v1722 = vld [vmem:[#allocation8 + $0x188] sm:$0xff]
    %v1723 = vld [vmem:[#allocation8 + $0x190] sm:$0xff]
    %v1724 = vld [vmem:[#allocation8 + $0x198] sm:$0xff]
    %v1725 = vld [vmem:[#allocation8 + $0x1a0] sm:$0xff]
    %v1726 = vld [vmem:[#allocation8 + $0x1a8] sm:$0xff]
    %v1727 = vld [vmem:[#allocation8 + $0x1b0] sm:$0xff]
    %v1728 = vld [vmem:[#allocation8 + $0x1b8] sm:$0xff]
    %v1729 = vld [vmem:[#allocation8 + $0x1c0] sm:$0xff]
    %v1730 = vld [vmem:[#allocation8 + $0x1c8] sm:$0xff]
    %v1731 = vld [vmem:[#allocation8 + $0x1d0] sm:$0xff]
    %v1732 = vld [vmem:[#allocation8 + $0x1d8] sm:$0xff]
    %v1733 = vld [vmem:[#allocation8 + $0x1e0] sm:$0xff]
    %v1734 = vld [vmem:[#allocation8 + $0x1e8] sm:$0xff]
    %v1735 = vld [vmem:[#allocation8 + $0x1f0] sm:$0xff]
    %v1736 = vld [vmem:[#allocation8 + $0x1f8] sm:$0xff]
    %v1737 = vld [vmem:[#allocation8 + $0x200] sm:$0xff]
    %v1738 = vld [vmem:[#allocation8 + $0x208] sm:$0xff]
    %v1739 = vld [vmem:[#allocation8 + $0x210] sm:$0xff]
    %v1740 = vld [vmem:[#allocation8 + $0x218] sm:$0xff]
    %v1741 = vld [vmem:[#allocation8 + $0x220] sm:$0xff]
    %v1742 = vld [vmem:[#allocation8 + $0x228] sm:$0xff]
    %v1743 = vld [vmem:[#allocation8 + $0x230] sm:$0xff]
    %v1744 = vld [vmem:[#allocation8 + $0x238] sm:$0xff]
    %v1745 = vld [vmem:[#allocation8 + $0x240] sm:$0xff]
    %v1746 = vld [vmem:[#allocation8 + $0x248] sm:$0xff]
    %v1747 = vld [vmem:[#allocation8 + $0x250] sm:$0xff]
    %v1748 = vld [vmem:[#allocation8 + $0x258] sm:$0xff]
    %v1749 = vld [vmem:[#allocation8 + $0x260] sm:$0xff]
    %v1750 = vld [vmem:[#allocation8 + $0x268] sm:$0xff]
    %v1751 = vld [vmem:[#allocation8 + $0x270] sm:$0xff]
    %v1752 = vld [vmem:[#allocation8 + $0x278] sm:$0xff]
    %v1753 = vld [vmem:[#allocation8 + $0x280] sm:$0xff]
    %v1754 = vld [vmem:[#allocation8 + $0x288] sm:$0xff]
    %v1755 = vld [vmem:[#allocation8 + $0x290] sm:$0xff]
    %v1756 = vld [vmem:[#allocation8 + $0x298] sm:$0xff]
    %v1757 = vld [vmem:[#allocation8 + $0x2a0] sm:$0xff]
    %v1758 = vld [vmem:[#allocation8 + $0x2a8] sm:$0xff]
    %v1759 = vld [vmem:[#allocation8 + $0x2b0] sm:$0xff]
    %v1760 = vld [vmem:[#allocation8 + $0x2b8] sm:$0xff]
    %v1761 = vld [vmem:[#allocation8 + $0x2c0] sm:$0xff]
    %v1762 = vld [vmem:[#allocation8 + $0x2c8] sm:$0xff]
    %v1763 = vld [vmem:[#allocation8 + $0x2d0] sm:$0xff]
    %v1764 = vld [vmem:[#allocation8 + $0x2d8] sm:$0xff]
    %v1765 = vld [vmem:[#allocation8 + $0x2e0] sm:$0xff]
    %v1766 = vld [vmem:[#allocation8 + $0x2e8] sm:$0xff]
    %v1767 = vld [vmem:[#allocation8 + $0x2f0] sm:$0xff]
    %v1768 = vld [vmem:[#allocation8 + $0x2f8] sm:$0xff]
    %v1769 = vld [vmem:[#allocation8 + $0x300] sm:$0xff]
    %v1770 = vld [vmem:[#allocation8 + $0x308] sm:$0xff]
    %v1771 = vld [vmem:[#allocation8 + $0x310] sm:$0xff]
    %v1772 = vld [vmem:[#allocation8 + $0x318] sm:$0xff]
    %v1773 = vld [vmem:[#allocation8 + $0x320] sm:$0xff]
    %v1774 = vld [vmem:[#allocation8 + $0x328] sm:$0xff]
    %v1775 = vld [vmem:[#allocation8 + $0x330] sm:$0xff]
    %v1776 = vld [vmem:[#allocation8 + $0x338] sm:$0xff]
    %v1777 = vld [vmem:[#allocation8 + $0x340] sm:$0xff]
    %v1778 = vld [vmem:[#allocation8 + $0x348] sm:$0xff]
    %v1779 = vld [vmem:[#allocation8 + $0x350] sm:$0xff]
    %v1780 = vld [vmem:[#allocation8 + $0x358] sm:$0xff]
    %v1781 = vld [vmem:[#allocation8 + $0x360] sm:$0xff]
    %v1782 = vld [vmem:[#allocation8 + $0x368] sm:$0xff]
    %v1783 = vld [vmem:[#allocation8 + $0x370] sm:$0xff]
    %v1784 = vld [vmem:[#allocation8 + $0x378] sm:$0xff]
    %v1785 = vld [vmem:[#allocation8 + $0x380] sm:$0xff]
    %v1786 = vld [vmem:[#allocation8 + $0x388] sm:$0xff]
    %v1787 = vld [vmem:[#allocation8 + $0x390] sm:$0xff]
    %v1788 = vld [vmem:[#allocation8 + $0x398] sm:$0xff]
    %v1789 = vld [vmem:[#allocation8 + $0x3a0] sm:$0xff]
    %v1790 = vld [vmem:[#allocation8 + $0x3a8] sm:$0xff]
    %v1791 = vld [vmem:[#allocation8 + $0x3b0] sm:$0xff]
    %v1792 = vld [vmem:[#allocation8 + $0x3b8] sm:$0xff]
    %v1793 = vld [vmem:[#allocation8 + $0x3c0] sm:$0xff]
    %v1794 = vld [vmem:[#allocation8 + $0x3c8] sm:$0xff]
    %v1795 = vld [vmem:[#allocation8 + $0x3d0] sm:$0xff]
    %v1796 = vld [vmem:[#allocation8 + $0x3d8] sm:$0xff]
    %v1797 = vld [vmem:[#allocation8 + $0x3e0] sm:$0xff]
    %v1798 = vld [vmem:[#allocation8 + $0x3e8] sm:$0xff]
    %v1799 = vld [vmem:[#allocation8 + $0x3f0] sm:$0xff]
    %v1800 = vld [vmem:[#allocation8 + $0x3f8] sm:$0xff]
    %v1801 = vld [vmem:[%s4] sm:$0xf]
    %v1803 = vlaneseq
    %v1804 = vshrl.u32 %v1803, 7
    %v1805 = vsub.s32 0, %v1804
    %v1806 = vrot.slane %v1801, %v1805
    %v1807 = vlaneseq
    %v1808 = vshrl.u32 %v1807, 7
    %v1809 = vsub.s32 1, %v1808
    %v1810 = vrot.slane %v1801, %v1809
    %v1811 = vlaneseq
    %v1812 = vshrl.u32 %v1811, 7
    %v1813 = vsub.s32 2, %v1812
    %v1814 = vrot.slane %v1801, %v1813
    %v1815 = vlaneseq
    %v1816 = vshrl.u32 %v1815, 7
    %v1817 = vsub.s32 3, %v1816
    %v1818 = vrot.slane %v1801, %v1817
    %v1951 = vunpack.c.l.b16 %v1673
    %v1952 = vunpack.c.h.b16 %v1673
    %v1953 = vunpack.c.l.b16 %v1674
    %v1954 = vunpack.c.h.b16 %v1674
    %v1955 = vunpack.c.l.b16 %v1675
    %v1956 = vunpack.c.h.b16 %v1675
    %v1957 = vunpack.c.l.b16 %v1676
    %v1958 = vunpack.c.h.b16 %v1676
    %v1959 = vunpack.c.l.b16 %v1677
    %v1960 = vunpack.c.h.b16 %v1677
    %v1961 = vunpack.c.l.b16 %v1678
    %v1962 = vunpack.c.h.b16 %v1678
    %v1963 = vunpack.c.l.b16 %v1679
    %v1964 = vunpack.c.h.b16 %v1679
    %v1965 = vunpack.c.l.b16 %v1680
    %v1966 = vunpack.c.h.b16 %v1680
    %v1967 = vunpack.c.l.b16 %v1681
    %v1968 = vunpack.c.h.b16 %v1681
    %v1969 = vunpack.c.l.b16 %v1682
    %v1970 = vunpack.c.h.b16 %v1682
    %v1971 = vunpack.c.l.b16 %v1683
    %v1972 = vunpack.c.h.b16 %v1683
    %v1973 = vunpack.c.l.b16 %v1684
    %v1974 = vunpack.c.h.b16 %v1684
    %v1975 = vunpack.c.l.b16 %v1685
    %v1976 = vunpack.c.h.b16 %v1685
    %v1977 = vunpack.c.l.b16 %v1686
    %v1978 = vunpack.c.h.b16 %v1686
    %v1979 = vunpack.c.l.b16 %v1687
    %v1980 = vunpack.c.h.b16 %v1687
    %v1981 = vunpack.c.l.b16 %v1688
    %v1982 = vunpack.c.h.b16 %v1688
    %v1983 = vunpack.c.l.b16 %v1689
    %v1984 = vunpack.c.h.b16 %v1689
    %v1985 = vunpack.c.l.b16 %v1690
    %v1986 = vunpack.c.h.b16 %v1690
    %v1987 = vunpack.c.l.b16 %v1691
    %v1988 = vunpack.c.h.b16 %v1691
    %v1989 = vunpack.c.l.b16 %v1692
    %v1990 = vunpack.c.h.b16 %v1692
    %v1991 = vunpack.c.l.b16 %v1693
    %v1992 = vunpack.c.h.b16 %v1693
    %v1993 = vunpack.c.l.b16 %v1694
    %v1994 = vunpack.c.h.b16 %v1694
    %v1995 = vunpack.c.l.b16 %v1695
    %v1996 = vunpack.c.h.b16 %v1695
    %v1997 = vunpack.c.l.b16 %v1696
    %v1998 = vunpack.c.h.b16 %v1696
    %v1999 = vunpack.c.l.b16 %v1697
    %v2000 = vunpack.c.h.b16 %v1697
    %v2001 = vunpack.c.l.b16 %v1698
    %v2002 = vunpack.c.h.b16 %v1698
    %v2003 = vunpack.c.l.b16 %v1699
    %v2004 = vunpack.c.h.b16 %v1699
    %v2005 = vunpack.c.l.b16 %v1700
    %v2006 = vunpack.c.h.b16 %v1700
    %v2007 = vunpack.c.l.b16 %v1701
    %v2008 = vunpack.c.h.b16 %v1701
    %v2009 = vunpack.c.l.b16 %v1702
    %v2010 = vunpack.c.h.b16 %v1702
    %v2011 = vunpack.c.l.b16 %v1703
    %v2012 = vunpack.c.h.b16 %v1703
    %v2013 = vunpack.c.l.b16 %v1704
    %v2014 = vunpack.c.h.b16 %v1704
    %v2015 = vunpack.c.l.b16 %v1705
    %v2016 = vunpack.c.h.b16 %v1705
    %v2017 = vunpack.c.l.b16 %v1706
    %v2018 = vunpack.c.h.b16 %v1706
    %v2019 = vunpack.c.l.b16 %v1707
    %v2020 = vunpack.c.h.b16 %v1707
    %v2021 = vunpack.c.l.b16 %v1708
    %v2022 = vunpack.c.h.b16 %v1708
    %v2023 = vunpack.c.l.b16 %v1709
    %v2024 = vunpack.c.h.b16 %v1709
    %v2025 = vunpack.c.l.b16 %v1710
    %v2026 = vunpack.c.h.b16 %v1710
    %v2027 = vunpack.c.l.b16 %v1711
    %v2028 = vunpack.c.h.b16 %v1711
    %v2029 = vunpack.c.l.b16 %v1712
    %v2030 = vunpack.c.h.b16 %v1712
    %v2031 = vunpack.c.l.b16 %v1713
    %v2032 = vunpack.c.h.b16 %v1713
    %v2033 = vunpack.c.l.b16 %v1714
    %v2034 = vunpack.c.h.b16 %v1714
    %v2035 = vunpack.c.l.b16 %v1715
    %v2036 = vunpack.c.h.b16 %v1715
    %v2037 = vunpack.c.l.b16 %v1716
    %v2038 = vunpack.c.h.b16 %v1716
    %v2039 = vunpack.c.l.b16 %v1717
    %v2040 = vunpack.c.h.b16 %v1717
    %v2041 = vunpack.c.l.b16 %v1718
    %v2042 = vunpack.c.h.b16 %v1718
    %v2043 = vunpack.c.l.b16 %v1719
    %v2044 = vunpack.c.h.b16 %v1719
    %v2045 = vunpack.c.l.b16 %v1720
    %v2046 = vunpack.c.h.b16 %v1720
    %v2047 = vunpack.c.l.b16 %v1721
    %v2048 = vunpack.c.h.b16 %v1721
    %v2049 = vunpack.c.l.b16 %v1722
    %v2050 = vunpack.c.h.b16 %v1722
    %v2051 = vunpack.c.l.b16 %v1723
    %v2052 = vunpack.c.h.b16 %v1723
    %v2053 = vunpack.c.l.b16 %v1724
    %v2054 = vunpack.c.h.b16 %v1724
    %v2055 = vunpack.c.l.b16 %v1725
    %v2056 = vunpack.c.h.b16 %v1725
    %v2057 = vunpack.c.l.b16 %v1726
    %v2058 = vunpack.c.h.b16 %v1726
    %v2059 = vunpack.c.l.b16 %v1727
    %v2060 = vunpack.c.h.b16 %v1727
    %v2061 = vunpack.c.l.b16 %v1728
    %v2062 = vunpack.c.h.b16 %v1728
    %v2063 = vunpack.c.l.b16 %v1729
    %v2064 = vunpack.c.h.b16 %v1729
    %v2065 = vunpack.c.l.b16 %v1730
    %v2066 = vunpack.c.h.b16 %v1730
    %v2067 = vunpack.c.l.b16 %v1731
    %v2068 = vunpack.c.h.b16 %v1731
    %v2069 = vunpack.c.l.b16 %v1732
    %v2070 = vunpack.c.h.b16 %v1732
    %v2071 = vunpack.c.l.b16 %v1733
    %v2072 = vunpack.c.h.b16 %v1733
    %v2073 = vunpack.c.l.b16 %v1734
    %v2074 = vunpack.c.h.b16 %v1734
    %v2075 = vunpack.c.l.b16 %v1735
    %v2076 = vunpack.c.h.b16 %v1735
    %v2077 = vunpack.c.l.b16 %v1736
    %v2078 = vunpack.c.h.b16 %v1736
    %v2079 = vunpack.c.l.b16 %v1737
    %v2080 = vunpack.c.h.b16 %v1737
    %v2081 = vunpack.c.l.b16 %v1738
    %v2082 = vunpack.c.h.b16 %v1738
    %v2083 = vunpack.c.l.b16 %v1739
    %v2084 = vunpack.c.h.b16 %v1739
    %v2085 = vunpack.c.l.b16 %v1740
    %v2086 = vunpack.c.h.b16 %v1740
    %v2087 = vunpack.c.l.b16 %v1741
    %v2088 = vunpack.c.h.b16 %v1741
    %v2089 = vunpack.c.l.b16 %v1742
    %v2090 = vunpack.c.h.b16 %v1742
    %v2091 = vunpack.c.l.b16 %v1743
    %v2092 = vunpack.c.h.b16 %v1743
    %v2093 = vunpack.c.l.b16 %v1744
    %v2094 = vunpack.c.h.b16 %v1744
    %v2095 = vunpack.c.l.b16 %v1745
    %v2096 = vunpack.c.h.b16 %v1745
    %v2097 = vunpack.c.l.b16 %v1746
    %v2098 = vunpack.c.h.b16 %v1746
    %v2099 = vunpack.c.l.b16 %v1747
    %v2100 = vunpack.c.h.b16 %v1747
    %v2101 = vunpack.c.l.b16 %v1748
    %v2102 = vunpack.c.h.b16 %v1748
    %v2103 = vunpack.c.l.b16 %v1749
    %v2104 = vunpack.c.h.b16 %v1749
    %v2105 = vunpack.c.l.b16 %v1750
    %v2106 = vunpack.c.h.b16 %v1750
    %v2107 = vunpack.c.l.b16 %v1751
    %v2108 = vunpack.c.h.b16 %v1751
    %v2109 = vunpack.c.l.b16 %v1752
    %v2110 = vunpack.c.h.b16 %v1752
    %v2111 = vunpack.c.l.b16 %v1753
    %v2112 = vunpack.c.h.b16 %v1753
    %v2113 = vunpack.c.l.b16 %v1754
    %v2114 = vunpack.c.h.b16 %v1754
    %v2115 = vunpack.c.l.b16 %v1755
    %v2116 = vunpack.c.h.b16 %v1755
    %v2117 = vunpack.c.l.b16 %v1756
    %v2118 = vunpack.c.h.b16 %v1756
    %v2119 = vunpack.c.l.b16 %v1757
    %v2120 = vunpack.c.h.b16 %v1757
    %v2121 = vunpack.c.l.b16 %v1758
    %v2122 = vunpack.c.h.b16 %v1758
    %v2123 = vunpack.c.l.b16 %v1759
    %v2124 = vunpack.c.h.b16 %v1759
    %v2125 = vunpack.c.l.b16 %v1760
    %v2126 = vunpack.c.h.b16 %v1760
    %v2127 = vunpack.c.l.b16 %v1761
    %v2128 = vunpack.c.h.b16 %v1761
    %v2129 = vunpack.c.l.b16 %v1762
    %v2130 = vunpack.c.h.b16 %v1762
    %v2131 = vunpack.c.l.b16 %v1763
    %v2132 = vunpack.c.h.b16 %v1763
    %v2133 = vunpack.c.l.b16 %v1764
    %v2134 = vunpack.c.h.b16 %v1764
    %v2135 = vunpack.c.l.b16 %v1765
    %v2136 = vunpack.c.h.b16 %v1765
    %v2137 = vunpack.c.l.b16 %v1766
    %v2138 = vunpack.c.h.b16 %v1766
    %v2139 = vunpack.c.l.b16 %v1767
    %v2140 = vunpack.c.h.b16 %v1767
    %v2141 = vunpack.c.l.b16 %v1768
    %v2142 = vunpack.c.h.b16 %v1768
    %v2143 = vunpack.c.l.b16 %v1769
    %v2144 = vunpack.c.h.b16 %v1769
    %v2145 = vunpack.c.l.b16 %v1770
    %v2146 = vunpack.c.h.b16 %v1770
    %v2147 = vunpack.c.l.b16 %v1771
    %v2148 = vunpack.c.h.b16 %v1771
    %v2149 = vunpack.c.l.b16 %v1772
    %v2150 = vunpack.c.h.b16 %v1772
    %v2151 = vunpack.c.l.b16 %v1773
    %v2152 = vunpack.c.h.b16 %v1773
    %v2153 = vunpack.c.l.b16 %v1774
    %v2154 = vunpack.c.h.b16 %v1774
    %v2155 = vunpack.c.l.b16 %v1775
    %v2156 = vunpack.c.h.b16 %v1775
    %v2157 = vunpack.c.l.b16 %v1776
    %v2158 = vunpack.c.h.b16 %v1776
    %v2159 = vunpack.c.l.b16 %v1777
    %v2160 = vunpack.c.h.b16 %v1777
    %v2161 = vunpack.c.l.b16 %v1778
    %v2162 = vunpack.c.h.b16 %v1778
    %v2163 = vunpack.c.l.b16 %v1779
    %v2164 = vunpack.c.h.b16 %v1779
    %v2165 = vunpack.c.l.b16 %v1780
    %v2166 = vunpack.c.h.b16 %v1780
    %v2167 = vunpack.c.l.b16 %v1781
    %v2168 = vunpack.c.h.b16 %v1781
    %v2169 = vunpack.c.l.b16 %v1782
    %v2170 = vunpack.c.h.b16 %v1782
    %v2171 = vunpack.c.l.b16 %v1783
    %v2172 = vunpack.c.h.b16 %v1783
    %v2173 = vunpack.c.l.b16 %v1784
    %v2174 = vunpack.c.h.b16 %v1784
    %v2175 = vunpack.c.l.b16 %v1785
    %v2176 = vunpack.c.h.b16 %v1785
    %v2177 = vunpack.c.l.b16 %v1786
    %v2178 = vunpack.c.h.b16 %v1786
    %v2179 = vunpack.c.l.b16 %v1787
    %v2180 = vunpack.c.h.b16 %v1787
    %v2181 = vunpack.c.l.b16 %v1788
    %v2182 = vunpack.c.h.b16 %v1788
    %v2183 = vunpack.c.l.b16 %v1789
    %v2184 = vunpack.c.h.b16 %v1789
    %v2185 = vunpack.c.l.b16 %v1790
    %v2186 = vunpack.c.h.b16 %v1790
    %v2187 = vunpack.c.l.b16 %v1791
    %v2188 = vunpack.c.h.b16 %v1791
    %v2189 = vunpack.c.l.b16 %v1792
    %v2190 = vunpack.c.h.b16 %v1792
    %v2191 = vunpack.c.l.b16 %v1793
    %v2192 = vunpack.c.h.b16 %v1793
    %v2193 = vunpack.c.l.b16 %v1794
    %v2194 = vunpack.c.h.b16 %v1794
    %v2195 = vunpack.c.l.b16 %v1795
    %v2196 = vunpack.c.h.b16 %v1795
    %v2197 = vunpack.c.l.b16 %v1796
    %v2198 = vunpack.c.h.b16 %v1796
    %v2199 = vunpack.c.l.b16 %v1797
    %v2200 = vunpack.c.h.b16 %v1797
    %v2201 = vunpack.c.l.b16 %v1798
    %v2202 = vunpack.c.h.b16 %v1798
    %v2203 = vunpack.c.l.b16 %v1799
    %v2204 = vunpack.c.h.b16 %v1799
    %v2205 = vunpack.c.l.b16 %v1800
    %v2206 = vunpack.c.h.b16 %v1800
    %v2207 = vpack.c.b16 %v1955, %v1951
    %v2208 = vpack.c.b16 %v1956, %v1952
    %v2209 = vpack.c.b16 %v1957, %v1953
    %v2210 = vpack.c.b16 %v1958, %v1954
    %v2211 = vpack.c.b16 %v1963, %v1959
    %v2212 = vpack.c.b16 %v1964, %v1960
    %v2213 = vpack.c.b16 %v1965, %v1961
    %v2214 = vpack.c.b16 %v1966, %v1962
    %v2215 = vpack.c.b16 %v1971, %v1967
    %v2216 = vpack.c.b16 %v1972, %v1968
    %v2217 = vpack.c.b16 %v1973, %v1969
    %v2218 = vpack.c.b16 %v1974, %v1970
    %v2219 = vpack.c.b16 %v1979, %v1975
    %v2220 = vpack.c.b16 %v1980, %v1976
    %v2221 = vpack.c.b16 %v1981, %v1977
    %v2222 = vpack.c.b16 %v1982, %v1978
    %v2223 = vpack.c.b16 %v1987, %v1983
    %v2224 = vpack.c.b16 %v1988, %v1984
    %v2225 = vpack.c.b16 %v1989, %v1985
    %v2226 = vpack.c.b16 %v1990, %v1986
    %v2227 = vpack.c.b16 %v1995, %v1991
    %v2228 = vpack.c.b16 %v1996, %v1992
    %v2229 = vpack.c.b16 %v1997, %v1993
    %v2230 = vpack.c.b16 %v1998, %v1994
    %v2231 = vpack.c.b16 %v2003, %v1999
    %v2232 = vpack.c.b16 %v2004, %v2000
    %v2233 = vpack.c.b16 %v2005, %v2001
    %v2234 = vpack.c.b16 %v2006, %v2002
    %v2235 = vpack.c.b16 %v2011, %v2007
    %v2236 = vpack.c.b16 %v2012, %v2008
    %v2237 = vpack.c.b16 %v2013, %v2009
    %v2238 = vpack.c.b16 %v2014, %v2010
    %v2239 = vpack.c.b16 %v2019, %v2015
    %v2240 = vpack.c.b16 %v2020, %v2016
    %v2241 = vpack.c.b16 %v2021, %v2017
    %v2242 = vpack.c.b16 %v2022, %v2018
    %v2243 = vpack.c.b16 %v2027, %v2023
    %v2244 = vpack.c.b16 %v2028, %v2024
    %v2245 = vpack.c.b16 %v2029, %v2025
    %v2246 = vpack.c.b16 %v2030, %v2026
    %v2247 = vpack.c.b16 %v2035, %v2031
    %v2248 = vpack.c.b16 %v2036, %v2032
    %v2249 = vpack.c.b16 %v2037, %v2033
    %v2250 = vpack.c.b16 %v2038, %v2034
    %v2251 = vpack.c.b16 %v2043, %v2039
    %v2252 = vpack.c.b16 %v2044, %v2040
    %v2253 = vpack.c.b16 %v2045, %v2041
    %v2254 = vpack.c.b16 %v2046, %v2042
    %v2255 = vpack.c.b16 %v2051, %v2047
    %v2256 = vpack.c.b16 %v2052, %v2048
    %v2257 = vpack.c.b16 %v2053, %v2049
    %v2258 = vpack.c.b16 %v2054, %v2050
    %v2259 = vpack.c.b16 %v2059, %v2055
    %v2260 = vpack.c.b16 %v2060, %v2056
    %v2261 = vpack.c.b16 %v2061, %v2057
    %v2262 = vpack.c.b16 %v2062, %v2058
    %v2263 = vpack.c.b16 %v2067, %v2063
    %v2264 = vpack.c.b16 %v2068, %v2064
    %v2265 = vpack.c.b16 %v2069, %v2065
    %v2266 = vpack.c.b16 %v2070, %v2066
    %v2267 = vpack.c.b16 %v2075, %v2071
    %v2268 = vpack.c.b16 %v2076, %v2072
    %v2269 = vpack.c.b16 %v2077, %v2073
    %v2270 = vpack.c.b16 %v2078, %v2074
    %v2271 = vpack.c.b16 %v2083, %v2079
    %v2272 = vpack.c.b16 %v2084, %v2080
    %v2273 = vpack.c.b16 %v2085, %v2081
    %v2274 = vpack.c.b16 %v2086, %v2082
    %v2275 = vpack.c.b16 %v2091, %v2087
    %v2276 = vpack.c.b16 %v2092, %v2088
    %v2277 = vpack.c.b16 %v2093, %v2089
    %v2278 = vpack.c.b16 %v2094, %v2090
    %v2279 = vpack.c.b16 %v2099, %v2095
    %v2280 = vpack.c.b16 %v2100, %v2096
    %v2281 = vpack.c.b16 %v2101, %v2097
    %v2282 = vpack.c.b16 %v2102, %v2098
    %v2283 = vpack.c.b16 %v2107, %v2103
    %v2284 = vpack.c.b16 %v2108, %v2104
    %v2285 = vpack.c.b16 %v2109, %v2105
    %v2286 = vpack.c.b16 %v2110, %v2106
    %v2287 = vpack.c.b16 %v2115, %v2111
    %v2288 = vpack.c.b16 %v2116, %v2112
    %v2289 = vpack.c.b16 %v2117, %v2113
    %v2290 = vpack.c.b16 %v2118, %v2114
    %v2291 = vpack.c.b16 %v2123, %v2119
    %v2292 = vpack.c.b16 %v2124, %v2120
    %v2293 = vpack.c.b16 %v2125, %v2121
    %v2294 = vpack.c.b16 %v2126, %v2122
    %v2295 = vpack.c.b16 %v2131, %v2127
    %v2296 = vpack.c.b16 %v2132, %v2128
    %v2297 = vpack.c.b16 %v2133, %v2129
    %v2298 = vpack.c.b16 %v2134, %v2130
    %v2299 = vpack.c.b16 %v2139, %v2135
    %v2300 = vpack.c.b16 %v2140, %v2136
    %v2301 = vpack.c.b16 %v2141, %v2137
    %v2302 = vpack.c.b16 %v2142, %v2138
    %v2303 = vpack.c.b16 %v2147, %v2143
    %v2304 = vpack.c.b16 %v2148, %v2144
    %v2305 = vpack.c.b16 %v2149, %v2145
    %v2306 = vpack.c.b16 %v2150, %v2146
    %v2307 = vpack.c.b16 %v2155, %v2151
    %v2308 = vpack.c.b16 %v2156, %v2152
    %v2309 = vpack.c.b16 %v2157, %v2153
    %v2310 = vpack.c.b16 %v2158, %v2154
    %v2311 = vpack.c.b16 %v2163, %v2159
    %v2312 = vpack.c.b16 %v2164, %v2160
    %v2313 = vpack.c.b16 %v2165, %v2161
    %v2314 = vpack.c.b16 %v2166, %v2162
    %v2315 = vpack.c.b16 %v2171, %v2167
    %v2316 = vpack.c.b16 %v2172, %v2168
    %v2317 = vpack.c.b16 %v2173, %v2169
    %v2318 = vpack.c.b16 %v2174, %v2170
    %v2319 = vpack.c.b16 %v2179, %v2175
    %v2320 = vpack.c.b16 %v2180, %v2176
    %v2321 = vpack.c.b16 %v2181, %v2177
    %v2322 = vpack.c.b16 %v2182, %v2178
    %v2323 = vpack.c.b16 %v2187, %v2183
    %v2324 = vpack.c.b16 %v2188, %v2184
    %v2325 = vpack.c.b16 %v2189, %v2185
    %v2326 = vpack.c.b16 %v2190, %v2186
    %v2327 = vpack.c.b16 %v2195, %v2191
    %v2328 = vpack.c.b16 %v2196, %v2192
    %v2329 = vpack.c.b16 %v2197, %v2193
    %v2330 = vpack.c.b16 %v2198, %v2194
    %v2331 = vpack.c.b16 %v2203, %v2199
    %v2332 = vpack.c.b16 %v2204, %v2200
    %v2333 = vpack.c.b16 %v2205, %v2201
    %v2334 = vpack.c.b16 %v2206, %v2202
    %2463 = vmatprep.subr.bf16.mxu0 %v2236
    %2464 = vmatpush1.bf16.msra.mxu0 %v2235
    %2465 = vmatprep.subr.bf16.mxu0 %v2232
    %2466 = vmatpush1.bf16.msra.mxu0 %v2231
    %2467 = vmatprep.subr.bf16.mxu0 %v2228
    %2468 = vmatpush1.bf16.msra.mxu0 %v2227
    %2469 = vmatprep.subr.bf16.mxu0 %v2224
    %2470 = vmatpush1.bf16.msra.mxu0 %v2223
    %2471 = vmatprep.subr.bf16.mxu0 %v2220
    %2472 = vmatpush1.bf16.msra.mxu0 %v2219
    %2473 = vmatprep.subr.bf16.mxu0 %v2216
    %2474 = vmatpush1.bf16.msra.mxu0 %v2215
    %2475 = vmatprep.subr.bf16.mxu0 %v2212
    %2476 = vmatpush1.bf16.msra.mxu0 %v2211
    %2477 = vmatprep.subr.bf16.mxu0 %v2208
    %2478 = vmatpush1.bf16.msra.mxu0 %v2207
    %2479 = vmatprep.subr.bf16.mxu0 %v2268
    %2480 = vmatpush2.bf16.msra.mxu0 %v2267
    %2481 = vmatprep.subr.bf16.mxu0 %v2264
    %2482 = vmatpush2.bf16.msra.mxu0 %v2263
    %2483 = vmatprep.subr.bf16.mxu0 %v2260
    %2484 = vmatpush2.bf16.msra.mxu0 %v2259
    %2485 = vmatprep.subr.bf16.mxu0 %v2256
    %2486 = vmatpush2.bf16.msra.mxu0 %v2255
    %2487 = vmatprep.subr.bf16.mxu0 %v2252
    %2488 = vmatpush2.bf16.msra.mxu0 %v2251
    %2489 = vmatprep.subr.bf16.mxu0 %v2248
    %2490 = vmatpush2.bf16.msra.mxu0 %v2247
    %2491 = vmatprep.subr.bf16.mxu0 %v2244
    %2492 = vmatpush2.bf16.msra.mxu0 %v2243
    %2493 = vmatprep.subr.bf16.mxu0 %v2240
    %2494 = vmatpush2.bf16.msra.mxu0 %v2239
    %2495 = vmatprep.mubr.bf16.mxu0 %v1670
    %2496 = vmatmul.mubr.bf16.gmra.mxu0 %v1669
    %v2497 = vpop.f32.mrf.mxu0
    %v2498 = vadd.f32 %v1806, %v2497
    %v2499 = vpop.f32.mrf.mxu0
    %v2500 = vadd.f32 %v1810, %v2499
    %v2501 = vpop.f32.mrf.mxu0
    %v2502 = vadd.f32 %v1806, %v2501
    %v2503 = vpop.f32.mrf.mxu0
    %v2504 = vadd.f32 %v1810, %v2503
    %2505 = vdwg.mxu0
    %2506 = vmatprep.subr.bf16.mxu0 %v2300
    %2507 = vmatpush1.bf16.msra.mxu0 %v2299
    %2508 = vmatprep.subr.bf16.mxu0 %v2296
    %2509 = vmatpush1.bf16.msra.mxu0 %v2295
    %2510 = vmatprep.subr.bf16.mxu0 %v2292
    %2511 = vmatpush1.bf16.msra.mxu0 %v2291
    %2512 = vmatprep.subr.bf16.mxu0 %v2288
    %2513 = vmatpush1.bf16.msra.mxu0 %v2287
    %2514 = vmatprep.subr.bf16.mxu0 %v2284
    %2515 = vmatpush1.bf16.msra.mxu0 %v2283
    %2516 = vmatprep.subr.bf16.mxu0 %v2280
    %2517 = vmatpush1.bf16.msra.mxu0 %v2279
    %2518 = vmatprep.subr.bf16.mxu0 %v2276
    %2519 = vmatpush1.bf16.msra.mxu0 %v2275
    %2520 = vmatprep.subr.bf16.mxu0 %v2272
    %2521 = vmatpush1.bf16.msra.mxu0 %v2271
    %2522 = vmatprep.subr.bf16.mxu0 %v2332
    %2523 = vmatpush2.bf16.msra.mxu0 %v2331
    %2524 = vmatprep.subr.bf16.mxu0 %v2328
    %2525 = vmatpush2.bf16.msra.mxu0 %v2327
    %2526 = vmatprep.subr.bf16.mxu0 %v2324
    %2527 = vmatpush2.bf16.msra.mxu0 %v2323
    %2528 = vmatprep.subr.bf16.mxu0 %v2320
    %2529 = vmatpush2.bf16.msra.mxu0 %v2319
    %2530 = vmatprep.subr.bf16.mxu0 %v2316
    %2531 = vmatpush2.bf16.msra.mxu0 %v2315
    %2532 = vmatprep.subr.bf16.mxu0 %v2312
    %2533 = vmatpush2.bf16.msra.mxu0 %v2311
    %2534 = vmatprep.subr.bf16.mxu0 %v2308
    %2535 = vmatpush2.bf16.msra.mxu0 %v2307
    %2536 = vmatprep.subr.bf16.mxu0 %v2304
    %2537 = vmatpush2.bf16.msra.mxu0 %v2303
    %2538 = vmatprep.mubr.bf16.mxu0 %v1672
    %2539 = vmatmul.mubr.bf16.gmra.mxu0 %v1671
    %v2540 = vpop.f32.mrf.mxu0
    %v2541 = vadd.f32 %v2498, %v2540
    %v2542 = vpop.f32.mrf.mxu0
    %v2543 = vadd.f32 %v2500, %v2542
    %v2544 = vpop.f32.mrf.mxu0
    %v2545 = vadd.f32 %v2502, %v2544
    %v2546 = vpop.f32.mrf.mxu0
    %v2547 = vadd.f32 %v2504, %v2546
    %2548 = vdwg.mxu0
    %2549 = vmatprep.subr.bf16.mxu0 %v2238
    %2550 = vmatpush1.bf16.msra.mxu0 %v2237
    %2551 = vmatprep.subr.bf16.mxu0 %v2234
    %2552 = vmatpush1.bf16.msra.mxu0 %v2233
    %2553 = vmatprep.subr.bf16.mxu0 %v2230
    %2554 = vmatpush1.bf16.msra.mxu0 %v2229
    %2555 = vmatprep.subr.bf16.mxu0 %v2226
    %2556 = vmatpush1.bf16.msra.mxu0 %v2225
    %2557 = vmatprep.subr.bf16.mxu0 %v2222
    %2558 = vmatpush1.bf16.msra.mxu0 %v2221
    %2559 = vmatprep.subr.bf16.mxu0 %v2218
    %2560 = vmatpush1.bf16.msra.mxu0 %v2217
    %2561 = vmatprep.subr.bf16.mxu0 %v2214
    %2562 = vmatpush1.bf16.msra.mxu0 %v2213
    %2563 = vmatprep.subr.bf16.mxu0 %v2210
    %2564 = vmatpush1.bf16.msra.mxu0 %v2209
    %2565 = vmatprep.subr.bf16.mxu0 %v2270
    %2566 = vmatpush2.bf16.msra.mxu0 %v2269
    %2567 = vmatprep.subr.bf16.mxu0 %v2266
    %2568 = vmatpush2.bf16.msra.mxu0 %v2265
    %2569 = vmatprep.subr.bf16.mxu0 %v2262
    %2570 = vmatpush2.bf16.msra.mxu0 %v2261
    %2571 = vmatprep.subr.bf16.mxu0 %v2258
    %2572 = vmatpush2.bf16.msra.mxu0 %v2257
    %2573 = vmatprep.subr.bf16.mxu0 %v2254
    %2574 = vmatpush2.bf16.msra.mxu0 %v2253
    %2575 = vmatprep.subr.bf16.mxu0 %v2250
    %2576 = vmatpush2.bf16.msra.mxu0 %v2249
    %2577 = vmatprep.subr.bf16.mxu0 %v2246
    %2578 = vmatpush2.bf16.msra.mxu0 %v2245
    %2579 = vmatprep.subr.bf16.mxu0 %v2242
    %2580 = vmatpush2.bf16.msra.mxu0 %v2241
    %2581 = vmatprep.mubr.bf16.mxu0 %v1670
    %2582 = vmatmul.mubr.bf16.gmra.mxu0 %v1669
    %v2583 = vpop.f32.mrf.mxu0
    %v2584 = vadd.f32 %v1814, %v2583
    %v2585 = vpop.f32.mrf.mxu0
    %v2586 = vadd.f32 %v1818, %v2585
    %v2587 = vpop.f32.mrf.mxu0
    %v2588 = vadd.f32 %v1814, %v2587
    %v2589 = vpop.f32.mrf.mxu0
    %v2590 = vadd.f32 %v1818, %v2589
    %2591 = vdwg.mxu0
    %2592 = vmatprep.subr.bf16.mxu0 %v2302
    %2593 = vmatpush1.bf16.msra.mxu0 %v2301
    %2594 = vmatprep.subr.bf16.mxu0 %v2298
    %2595 = vmatpush1.bf16.msra.mxu0 %v2297
    %2596 = vmatprep.subr.bf16.mxu0 %v2294
    %2597 = vmatpush1.bf16.msra.mxu0 %v2293
    %2598 = vmatprep.subr.bf16.mxu0 %v2290
    %2599 = vmatpush1.bf16.msra.mxu0 %v2289
    %2600 = vmatprep.subr.bf16.mxu0 %v2286
    %2601 = vmatpush1.bf16.msra.mxu0 %v2285
    %2602 = vmatprep.subr.bf16.mxu0 %v2282
    %2603 = vmatpush1.bf16.msra.mxu0 %v2281
    %2604 = vmatprep.subr.bf16.mxu0 %v2278
    %2605 = vmatpush1.bf16.msra.mxu0 %v2277
    %2606 = vmatprep.subr.bf16.mxu0 %v2274
    %2607 = vmatpush1.bf16.msra.mxu0 %v2273
    %2608 = vmatprep.subr.bf16.mxu0 %v2334
    %2609 = vmatpush2.bf16.msra.mxu0 %v2333
    %2610 = vmatprep.subr.bf16.mxu0 %v2330
    %2611 = vmatpush2.bf16.msra.mxu0 %v2329
    %2612 = vmatprep.subr.bf16.mxu0 %v2326
    %2613 = vmatpush2.bf16.msra.mxu0 %v2325
    %2614 = vmatprep.subr.bf16.mxu0 %v2322
    %2615 = vmatpush2.bf16.msra.mxu0 %v2321
    %2616 = vmatprep.subr.bf16.mxu0 %v2318
    %2617 = vmatpush2.bf16.msra.mxu0 %v2317
    %2618 = vmatprep.subr.bf16.mxu0 %v2314
    %2619 = vmatpush2.bf16.msra.mxu0 %v2313
    %2620 = vmatprep.subr.bf16.mxu0 %v2310
    %2621 = vmatpush2.bf16.msra.mxu0 %v2309
    %2622 = vmatprep.subr.bf16.mxu0 %v2306
    %2623 = vmatpush2.bf16.msra.mxu0 %v2305
    %2624 = vmatprep.mubr.bf16.mxu0 %v1672
    %2625 = vmatmul.mubr.bf16.gmra.mxu0 %v1671
    %v2626 = vpop.f32.mrf.mxu0
    %v2627 = vadd.f32 %v2584, %v2626
    %v2628 = vpop.f32.mrf.mxu0
    %v2629 = vadd.f32 %v2586, %v2628
    %v2630 = vpop.f32.mrf.mxu0
    %v2631 = vadd.f32 %v2588, %v2630
    %v2632 = vpop.f32.mrf.mxu0
    %v2633 = vadd.f32 %v2590, %v2632
    %2634 = vdwg.mxu0
    %v2635 = vmax.f32 %v2541, 0.0
    %v2636 = vmax.f32 %v2543, 0.0
    %v2637 = vmax.f32 %v2627, 0.0
    %v2638 = vmax.f32 %v2629, 0.0
    %v2639 = vmax.f32 %v2545, 0.0
    %v2640 = vmax.f32 %v2547, 0.0
    %v2641 = vmax.f32 %v2631, 0.0
    %v2642 = vmax.f32 %v2633, 0.0
    %v2643 = vpack.c.bf16 %v2639, %v2635
    %v2644 = vpack.c.bf16 %v2640, %v2636
    %v2645 = vpack.c.bf16 %v2641, %v2637
    %v2646 = vpack.c.bf16 %v2642, %v2638
    %v2647 = vld [vmem:[#allocation10] sm:$0xf]
    %v2648 = vld [vmem:[#allocation10 + $0x4] sm:$0xf]
    %v2649 = vld [vmem:[#allocation10 + $0x8] sm:$0xf]
    %v2650 = vld [vmem:[#allocation10 + $0xc] sm:$0xf]
    %v2651 = vld [vmem:[#allocation10 + $0x10] sm:$0xf]
    %v2652 = vld [vmem:[#allocation10 + $0x14] sm:$0xf]
    %v2653 = vld [vmem:[#allocation10 + $0x18] sm:$0xf]
    %v2654 = vld [vmem:[#allocation10 + $0x1c] sm:$0xf]
    %v2655 = vld [vmem:[#allocation10 + $0x20] sm:$0xf]
    %v2656 = vld [vmem:[#allocation10 + $0x24] sm:$0xf]
    %v2657 = vld [vmem:[#allocation10 + $0x28] sm:$0xf]
    %v2658 = vld [vmem:[#allocation10 + $0x2c] sm:$0xf]
    %v2659 = vld [vmem:[#allocation10 + $0x30] sm:$0xf]
    %v2660 = vld [vmem:[#allocation10 + $0x34] sm:$0xf]
    %v2661 = vld [vmem:[#allocation10 + $0x38] sm:$0xf]
    %v2662 = vld [vmem:[#allocation10 + $0x3c] sm:$0xf]
    %v2663 = vld [vmem:[#allocation10 + $0x40] sm:$0xf]
    %v2664 = vld [vmem:[#allocation10 + $0x44] sm:$0xf]
    %v2665 = vld [vmem:[#allocation10 + $0x48] sm:$0xf]
    %v2666 = vld [vmem:[#allocation10 + $0x4c] sm:$0xf]
    %v2667 = vld [vmem:[#allocation10 + $0x50] sm:$0xf]
    %v2668 = vld [vmem:[#allocation10 + $0x54] sm:$0xf]
    %v2669 = vld [vmem:[#allocation10 + $0x58] sm:$0xf]
    %v2670 = vld [vmem:[#allocation10 + $0x5c] sm:$0xf]
    %v2671 = vld [vmem:[#allocation10 + $0x60] sm:$0xf]
    %v2672 = vld [vmem:[#allocation10 + $0x64] sm:$0xf]
    %v2673 = vld [vmem:[#allocation10 + $0x68] sm:$0xf]
    %v2674 = vld [vmem:[#allocation10 + $0x6c] sm:$0xf]
    %v2675 = vld [vmem:[#allocation10 + $0x70] sm:$0xf]
    %v2676 = vld [vmem:[#allocation10 + $0x74] sm:$0xf]
    %v2677 = vld [vmem:[#allocation10 + $0x78] sm:$0xf]
    %v2678 = vld [vmem:[#allocation10 + $0x7c] sm:$0xf]
    %v2679 = vld [vmem:[#allocation10 + $0x80] sm:$0xf]
    %v2680 = vld [vmem:[#allocation10 + $0x84] sm:$0xf]
    %v2681 = vld [vmem:[#allocation10 + $0x88] sm:$0xf]
    %v2682 = vld [vmem:[#allocation10 + $0x8c] sm:$0xf]
    %v2683 = vld [vmem:[#allocation10 + $0x90] sm:$0xf]
    %v2684 = vld [vmem:[#allocation10 + $0x94] sm:$0xf]
    %v2685 = vld [vmem:[#allocation10 + $0x98] sm:$0xf]
    %v2686 = vld [vmem:[#allocation10 + $0x9c] sm:$0xf]
    %v2687 = vld [vmem:[#allocation10 + $0xa0] sm:$0xf]
    %v2688 = vld [vmem:[#allocation10 + $0xa4] sm:$0xf]
    %v2689 = vld [vmem:[#allocation10 + $0xa8] sm:$0xf]
    %v2690 = vld [vmem:[#allocation10 + $0xac] sm:$0xf]
    %v2691 = vld [vmem:[#allocation10 + $0xb0] sm:$0xf]
    %v2692 = vld [vmem:[#allocation10 + $0xb4] sm:$0xf]
    %v2693 = vld [vmem:[#allocation10 + $0xb8] sm:$0xf]
    %v2694 = vld [vmem:[#allocation10 + $0xbc] sm:$0xf]
    %v2695 = vld [vmem:[#allocation10 + $0xc0] sm:$0xf]
    %v2696 = vld [vmem:[#allocation10 + $0xc4] sm:$0xf]
    %v2697 = vld [vmem:[#allocation10 + $0xc8] sm:$0xf]
    %v2698 = vld [vmem:[#allocation10 + $0xcc] sm:$0xf]
    %v2699 = vld [vmem:[#allocation10 + $0xd0] sm:$0xf]
    %v2700 = vld [vmem:[#allocation10 + $0xd4] sm:$0xf]
    %v2701 = vld [vmem:[#allocation10 + $0xd8] sm:$0xf]
    %v2702 = vld [vmem:[#allocation10 + $0xdc] sm:$0xf]
    %v2703 = vld [vmem:[#allocation10 + $0xe0] sm:$0xf]
    %v2704 = vld [vmem:[#allocation10 + $0xe4] sm:$0xf]
    %v2705 = vld [vmem:[#allocation10 + $0xe8] sm:$0xf]
    %v2706 = vld [vmem:[#allocation10 + $0xec] sm:$0xf]
    %v2707 = vld [vmem:[#allocation10 + $0xf0] sm:$0xf]
    %v2708 = vld [vmem:[#allocation10 + $0xf4] sm:$0xf]
    %v2709 = vld [vmem:[#allocation10 + $0xf8] sm:$0xf]
    %v2710 = vld [vmem:[#allocation10 + $0xfc] sm:$0xf]
    %v2711 = vld [vmem:[%s6] sm:$0x1]
    %v2713 = vlaneseq
    %v2714 = vshrl.u32 %v2713, 7
    %v2715 = vsub.s32 0, %v2714
    %v2716 = vrot.slane %v2711, %v2715
    %v2782 = vunpack.c.l.b16 %v2647
    %v2783 = vunpack.c.l.b16 %v2648
    %v2784 = vunpack.c.l.b16 %v2649
    %v2785 = vunpack.c.l.b16 %v2650
    %v2786 = vunpack.c.l.b16 %v2651
    %v2787 = vunpack.c.l.b16 %v2652
    %v2788 = vunpack.c.l.b16 %v2653
    %v2789 = vunpack.c.l.b16 %v2654
    %v2790 = vunpack.c.l.b16 %v2655
    %v2791 = vunpack.c.l.b16 %v2656
    %v2792 = vunpack.c.l.b16 %v2657
    %v2793 = vunpack.c.l.b16 %v2658
    %v2794 = vunpack.c.l.b16 %v2659
    %v2795 = vunpack.c.l.b16 %v2660
    %v2796 = vunpack.c.l.b16 %v2661
    %v2797 = vunpack.c.l.b16 %v2662
    %v2798 = vunpack.c.l.b16 %v2663
    %v2799 = vunpack.c.l.b16 %v2664
    %v2800 = vunpack.c.l.b16 %v2665
    %v2801 = vunpack.c.l.b16 %v2666
    %v2802 = vunpack.c.l.b16 %v2667
    %v2803 = vunpack.c.l.b16 %v2668
    %v2804 = vunpack.c.l.b16 %v2669
    %v2805 = vunpack.c.l.b16 %v2670
    %v2806 = vunpack.c.l.b16 %v2671
    %v2807 = vunpack.c.l.b16 %v2672
    %v2808 = vunpack.c.l.b16 %v2673
    %v2809 = vunpack.c.l.b16 %v2674
    %v2810 = vunpack.c.l.b16 %v2675
    %v2811 = vunpack.c.l.b16 %v2676
    %v2812 = vunpack.c.l.b16 %v2677
    %v2813 = vunpack.c.l.b16 %v2678
    %v2814 = vunpack.c.l.b16 %v2679
    %v2815 = vunpack.c.l.b16 %v2680
    %v2816 = vunpack.c.l.b16 %v2681
    %v2817 = vunpack.c.l.b16 %v2682
    %v2818 = vunpack.c.l.b16 %v2683
    %v2819 = vunpack.c.l.b16 %v2684
    %v2820 = vunpack.c.l.b16 %v2685
    %v2821 = vunpack.c.l.b16 %v2686
    %v2822 = vunpack.c.l.b16 %v2687
    %v2823 = vunpack.c.l.b16 %v2688
    %v2824 = vunpack.c.l.b16 %v2689
    %v2825 = vunpack.c.l.b16 %v2690
    %v2826 = vunpack.c.l.b16 %v2691
    %v2827 = vunpack.c.l.b16 %v2692
    %v2828 = vunpack.c.l.b16 %v2693
    %v2829 = vunpack.c.l.b16 %v2694
    %v2830 = vunpack.c.l.b16 %v2695
    %v2831 = vunpack.c.l.b16 %v2696
    %v2832 = vunpack.c.l.b16 %v2697
    %v2833 = vunpack.c.l.b16 %v2698
    %v2834 = vunpack.c.l.b16 %v2699
    %v2835 = vunpack.c.l.b16 %v2700
    %v2836 = vunpack.c.l.b16 %v2701
    %v2837 = vunpack.c.l.b16 %v2702
    %v2838 = vunpack.c.l.b16 %v2703
    %v2839 = vunpack.c.l.b16 %v2704
    %v2840 = vunpack.c.l.b16 %v2705
    %v2841 = vunpack.c.l.b16 %v2706
    %v2842 = vunpack.c.l.b16 %v2707
    %v2843 = vunpack.c.l.b16 %v2708
    %v2844 = vunpack.c.l.b16 %v2709
    %v2845 = vunpack.c.l.b16 %v2710
    %v2846 = vpack.c.b16 %v2783, %v2782
    %v2847 = vpack.c.b16 %v2785, %v2784
    %v2848 = vpack.c.b16 %v2787, %v2786
    %v2849 = vpack.c.b16 %v2789, %v2788
    %v2850 = vpack.c.b16 %v2791, %v2790
    %v2851 = vpack.c.b16 %v2793, %v2792
    %v2852 = vpack.c.b16 %v2795, %v2794
    %v2853 = vpack.c.b16 %v2797, %v2796
    %v2854 = vpack.c.b16 %v2799, %v2798
    %v2855 = vpack.c.b16 %v2801, %v2800
    %v2856 = vpack.c.b16 %v2803, %v2802
    %v2857 = vpack.c.b16 %v2805, %v2804
    %v2858 = vpack.c.b16 %v2807, %v2806
    %v2859 = vpack.c.b16 %v2809, %v2808
    %v2860 = vpack.c.b16 %v2811, %v2810
    %v2861 = vpack.c.b16 %v2813, %v2812
    %v2862 = vpack.c.b16 %v2815, %v2814
    %v2863 = vpack.c.b16 %v2817, %v2816
    %v2864 = vpack.c.b16 %v2819, %v2818
    %v2865 = vpack.c.b16 %v2821, %v2820
    %v2866 = vpack.c.b16 %v2823, %v2822
    %v2867 = vpack.c.b16 %v2825, %v2824
    %v2868 = vpack.c.b16 %v2827, %v2826
    %v2869 = vpack.c.b16 %v2829, %v2828
    %v2870 = vpack.c.b16 %v2831, %v2830
    %v2871 = vpack.c.b16 %v2833, %v2832
    %v2872 = vpack.c.b16 %v2835, %v2834
    %v2873 = vpack.c.b16 %v2837, %v2836
    %v2874 = vpack.c.b16 %v2839, %v2838
    %v2875 = vpack.c.b16 %v2841, %v2840
    %v2876 = vpack.c.b16 %v2843, %v2842
    %v2877 = vpack.c.b16 %v2845, %v2844
    %2910 = vmatprep.subr.bf16.mxu0 0
    %2911 = vmatpush1.bf16.msra.mxu0 %v2853
    %2912 = vmatprep.subr.bf16.mxu0 0
    %2913 = vmatpush1.bf16.msra.mxu0 %v2852
    %2914 = vmatprep.subr.bf16.mxu0 0
    %2915 = vmatpush1.bf16.msra.mxu0 %v2851
    %2916 = vmatprep.subr.bf16.mxu0 0
    %2917 = vmatpush1.bf16.msra.mxu0 %v2850
    %2918 = vmatprep.subr.bf16.mxu0 0
    %2919 = vmatpush1.bf16.msra.mxu0 %v2849
    %2920 = vmatprep.subr.bf16.mxu0 0
    %2921 = vmatpush1.bf16.msra.mxu0 %v2848
    %2922 = vmatprep.subr.bf16.mxu0 0
    %2923 = vmatpush1.bf16.msra.mxu0 %v2847
    %2924 = vmatprep.subr.bf16.mxu0 0
    %2925 = vmatpush1.bf16.msra.mxu0 %v2846
    %2926 = vmatprep.subr.bf16.mxu0 0
    %2927 = vmatpush2.bf16.msra.mxu0 %v2861
    %2928 = vmatprep.subr.bf16.mxu0 0
    %2929 = vmatpush2.bf16.msra.mxu0 %v2860
    %2930 = vmatprep.subr.bf16.mxu0 0
    %2931 = vmatpush2.bf16.msra.mxu0 %v2859
    %2932 = vmatprep.subr.bf16.mxu0 0
    %2933 = vmatpush2.bf16.msra.mxu0 %v2858
    %2934 = vmatprep.subr.bf16.mxu0 0
    %2935 = vmatpush2.bf16.msra.mxu0 %v2857
    %2936 = vmatprep.subr.bf16.mxu0 0
    %2937 = vmatpush2.bf16.msra.mxu0 %v2856
    %2938 = vmatprep.subr.bf16.mxu0 0
    %2939 = vmatpush2.bf16.msra.mxu0 %v2855
    %2940 = vmatprep.subr.bf16.mxu0 0
    %2941 = vmatpush2.bf16.msra.mxu0 %v2854
    %2942 = vmatprep.mubr.bf16.mxu0 %v2644
    %2943 = vmatmul.mubr.bf16.gmra.mxu0 %v2643
    %v2944 = vpop.f32.mrf.mxu0
    %v2945 = vadd.f32 %v2716, %v2944
    %v2946 = vpop.f32.mrf.mxu0
    %v2947 = vpop.f32.mrf.mxu0
    %v2948 = vadd.f32 %v2716, %v2947
    %v2949 = vpop.f32.mrf.mxu0
    %2950 = vdwg.mxu0
    %2951 = vmatprep.subr.bf16.mxu0 0
    %2952 = vmatpush1.bf16.msra.mxu0 %v2869
    %2953 = vmatprep.subr.bf16.mxu0 0
    %2954 = vmatpush1.bf16.msra.mxu0 %v2868
    %2955 = vmatprep.subr.bf16.mxu0 0
    %2956 = vmatpush1.bf16.msra.mxu0 %v2867
    %2957 = vmatprep.subr.bf16.mxu0 0
    %2958 = vmatpush1.bf16.msra.mxu0 %v2866
    %2959 = vmatprep.subr.bf16.mxu0 0
    %2960 = vmatpush1.bf16.msra.mxu0 %v2865
    %2961 = vmatprep.subr.bf16.mxu0 0
    %2962 = vmatpush1.bf16.msra.mxu0 %v2864
    %2963 = vmatprep.subr.bf16.mxu0 0
    %2964 = vmatpush1.bf16.msra.mxu0 %v2863
    %2965 = vmatprep.subr.bf16.mxu0 0
    %2966 = vmatpush1.bf16.msra.mxu0 %v2862
    %2967 = vmatprep.subr.bf16.mxu0 0
    %2968 = vmatpush2.bf16.msra.mxu0 %v2877
    %2969 = vmatprep.subr.bf16.mxu0 0
    %2970 = vmatpush2.bf16.msra.mxu0 %v2876
    %2971 = vmatprep.subr.bf16.mxu0 0
    %2972 = vmatpush2.bf16.msra.mxu0 %v2875
    %2973 = vmatprep.subr.bf16.mxu0 0
    %2974 = vmatpush2.bf16.msra.mxu0 %v2874
    %2975 = vmatprep.subr.bf16.mxu0 0
    %2976 = vmatpush2.bf16.msra.mxu0 %v2873
    %2977 = vmatprep.subr.bf16.mxu0 0
    %2978 = vmatpush2.bf16.msra.mxu0 %v2872
    %2979 = vmatprep.subr.bf16.mxu0 0
    %2980 = vmatpush2.bf16.msra.mxu0 %v2871
    %2981 = vmatprep.subr.bf16.mxu0 0
    %2982 = vmatpush2.bf16.msra.mxu0 %v2870
    %2983 = vmatprep.mubr.bf16.mxu0 %v2646
    %2984 = vmatmul.mubr.bf16.gmra.mxu0 %v2645
    %v2985 = vpop.f32.mrf.mxu0
    %v2986 = vadd.f32 %v2945, %v2985
    %v2987 = vpop.f32.mrf.mxu0
    %v2988 = vpop.f32.mrf.mxu0
    %v2989 = vadd.f32 %v2948, %v2988
    %v2990 = vpop.f32.mrf.mxu0
    %2991 = vdwg.mxu0
    %v2992 = vlaneseq
    %v2993 = vand.u32 %v2992, 127
    %vm2994 = vcmp.lt.s32.totalorder %v2993, 10
    %v2995 = vsel %vm2994, %v2986, -1e+30
    %v2996 = vsel %vm2994, %v2989, -1e+30
    %2997 = vmax.xlane.f32.xlu0 %v2995
    %v2998 = vpop.xlane.xlu0 %2997
    %2999 = vmax.xlane.f32.xlu0 %v2996
    %v3000 = vpop.xlane.xlu0 %2999
    %v3001 = vsub.f32 %v2995, %v2998
    %v3002 = vsub.f32 %v2996, %v3000
    %v3003 = vmul.f32 %v3001, 1.442695
    %v3004 = vpow.pop %v3003
    %v3005 = vmul.f32 %v3002, 1.442695
    %v3006 = vpow.pop %v3005
    %3007 = vadd.xlane.f32.xlu0 %v3004
    %v3008 = vpop.xlane.xlu0 %3007
    %3009 = vadd.xlane.f32.xlu0 %v3006
    %v3010 = vpop.xlane.xlu0 %3009
    %v3011 = vrcp.pop %v3008
    %v3012 = vrcp.pop %v3010
    %v3013 = vmul.f32 %v3004, %v3011
    %v3014 = vmul.f32 %v3006, %v3012
    %3015 = vst [vmem:[#allocation11] sm:$0xff] %v3013
    %3016 = vst [vmem:[#allocation11 + $0x8] sm:$0xff] %v3014
    // Predicated region
    $region50: #{tpu_custom_call.1} parent=1 // pred_check
      _
    $region51: #{tpu_custom_call.1} parent=1 // pred_check_branch
      %3018 = sbr.rel (0) target = $region53
    $region52: #{tpu_custom_call.1} parent=1 // pred_region
      %s3020 = ssub.s32 256, 256
      %3021 = vsyncadd [#allocation4], %s3020
      %s3022 = sshll.u32 [#allocation11], 4
      %s3023 = int_to_ptr.vmem [resolvable:$true] %s3022
      %3028 = dma.vmem_to_hbm [thread:$0]  %s3023, 256, %s7, [#allocation4], 128, 128, 8
    $region53: #{tpu_custom_call.1} parent=1 // pred_fallthru
      _
    // Predicated region
    $region54: #{tpu_custom_call.1} parent=1 // pred_check
      _
    $region55: #{tpu_custom_call.1} parent=1 // pred_check_branch
      %3030 = sbr.rel (0) target = $region57
    $region56: #{tpu_custom_call.1} parent=1 // pred_region
      %3031 = dma.done [#allocation4], 256
    $region57: #{tpu_custom_call.1} parent=1 // pred_fallthru
      _
    %3032 = vsyncpa [#allocation3], 1
    %3033 = vsyncpa [#allocation6], 1
    %3034 = vsyncpa [#allocation9], 1
    %3035 = vsyncpa [#allocation4], 1

</llo_original>
